<compile_context>
chip_gen: v7x
topology: tpu7x:2x2x1
jax: 0.10.0
libtpu: 0.0.40
codegen_flags: <defaults>
</compile_context>

<pallas_src>
import functools

import jax
import jax.numpy as jnp
from jax.experimental import pallas as pl
from jax.experimental.pallas import tpu as pltpu


def _round_up(x, m):
    return ((x + m - 1) // m) * m


def _conv_shift_matmul_kernel(x_ref, w_ref, o_ref, *, KH, KW, Wp, NP):
    """One batch image per grid step.

    x_ref: (1, Cin, NPAD)     zero-padded image, spatial dims flattened (lanes)
    w_ref: (KH*KW, Cout, Cin) one (Cout, Cin) weight tile per filter tap
    o_ref: (1, Cout, NP)      stride-1 conv output over the padded grid (lanes)
    """
    cout = o_ref.shape[1]
    acc = jnp.zeros((cout, NP), jnp.float32)
    # Fused im2col: each filter tap is a static lane-shifted window of the
    # flattened image; contraction over Cin runs on the MXU, accumulation over
    # the KH*KW taps stays in f32 registers (Python loop unrolled at trace time).
    for kh in range(KH):
        for kw in range(KW):
            s = kh * Wp + kw                       # static lane shift
            xs = x_ref[0, :, pl.ds(s, NP)]         # (Cin, NP)    lane-dense
            wk = w_ref[kh * KW + kw]               # (Cout, Cin)  tiny, resident
            acc = acc + jnp.dot(wk, xs, preferred_element_type=jnp.float32)
    o_ref[0] = acc.astype(o_ref.dtype)


def decomposed_conv2d(x, filters, stride=(1, 1), padding=(0, 0), *,
                      compute_dtype=jnp.float32):
    """Forward pass of DecomposedConv2d (== conv2d, NCHW input / OIHW filters).

    x:       [B, Cin, H, W]   float32
    filters: [Cout, Cin, KH, KW]
    returns: [B, Cout, OH, OW] float32
    compute_dtype: operand dtype fed to the MXU (bf16 recommended on v6e/v7x
                   for HBM bandwidth; accumulation is always f32).
    """
    if isinstance(stride, int):
        stride = (stride, stride)
    if isinstance(padding, int):
        padding = (padding, padding)
    B, Cin, H, W = x.shape
    Cout, _, KH, KW = filters.shape
    sh, sw = stride
    ph, pw = padding

    OH = (H - KH + 2 * ph) // sh + 1
    OW = (W - KW + 2 * pw) // sw + 1

    Hp, Wp = H + 2 * ph, W + 2 * pw
    OH1 = Hp - KH + 1                      # stride-1 output rows on padded grid
    NP = _round_up(OH1 * Wp, 128)          # lane-dense output width (unmasked vst)
    max_shift = (KH - 1) * Wp + (KW - 1)
    NPAD = _round_up(NP + max_shift, 128)  # lane-aligned, keeps every tap window
                                           # in-bounds

    # --- glue: zero-pad + flatten spatial dims (input read amp ~Hp*Wp/(H*W),
    #           NOT KH*KW; no patch matrix ever touches HBM). ---
    xp = jnp.pad(x, ((0, 0), (0, 0), (ph, ph), (pw, pw)))
    xflat = xp.reshape(B, Cin, Hp * Wp)
    xflat = jnp.pad(xflat, ((0, 0), (0, 0), (0, NPAD - Hp * Wp)))
    xflat = xflat.astype(compute_dtype)

    # [Cout, Cin, KH, KW] -> [KH*KW, Cout, Cin]  (tiny, layout only)
    wtaps = filters.transpose(2, 3, 0, 1).reshape(KH * KW, Cout, Cin)
    wtaps = wtaps.astype(compute_dtype)

    kernel = functools.partial(
        _conv_shift_matmul_kernel, KH=KH, KW=KW, Wp=Wp, NP=NP)

    flops = 2 * B * Cout * Cin * KH * KW * NP
    bytes_accessed = (xflat.size * xflat.dtype.itemsize
                      + wtaps.size * wtaps.dtype.itemsize
                      + B * Cout * NP * 4)

    out_flat = pl.pallas_call(
        kernel,
        out_shape=jax.ShapeDtypeStruct((B, Cout, NP), jnp.float32),
        grid_spec=pltpu.PrefetchScalarGridSpec(
            num_scalar_prefetch=0,
            grid=(B,),
            in_specs=[
                # one whole (padded, flattened) image per step; last two block
                # dims equal the array dims -> exempt from (8,128) divisibility
                pl.BlockSpec((1, Cin, NPAD), lambda b: (b, 0, 0)),
                # grid-invariant tiny weight tensor, kept fully resident
                pl.BlockSpec((KH * KW, Cout, Cin), lambda b: (0, 0, 0)),
            ],
            out_specs=pl.BlockSpec((1, Cout, NP), lambda b: (b, 0, 0)),
        ),
        compiler_params=pltpu.CompilerParams(
            dimension_semantics=("parallel",),     # batch across TCs on v7x
            vmem_limit_bytes=32 * 1024 * 1024,
        ),
        cost_estimate=pl.CostEstimate(
            flops=flops, transcendentals=0, bytes_accessed=bytes_accessed),
    )(xflat, wtaps)

    # Epilogue: trim the stride-1 padded grid to the requested output.
    # Pure slice + reshape (axis order preserved, no transpose) -> single fused
    # XLA copy of output size.  Stride > 1 handled by subsampling (correct,
    # recomputes sh*sw extra positions inside the kernel).
    out = out_flat[:, :, : OH1 * Wp].reshape(B, Cout, OH1, Wp)
    out = out[:, :, : (OH - 1) * sh + 1: sh, : (OW - 1) * sw + 1: sw]
    return out


def _reference_conv2d(x, filters, stride, padding):
    # plain-JAX reference (equivalent to torch F.conv2d in NCHW / OIHW)
    return jax.lax.conv_general_dilated(
        x, filters,
        window_strides=stride,
        padding=[(padding[0], padding[0]), (padding[1], padding[1])],
        dimension_numbers=("NCHW", "OIHW", "NCHW"),
    )


if __name__ == "__main__":
    # Module config: in_channels=4, out_channels=6, kernel_size=3, stride=1, padding=1
    in_channels, out_channels = 4, 6
    kernel_size = (3, 3)
    stride = (1, 1)
    padding = (1, 1)

    key = jax.random.PRNGKey(0)
    kx, kw = jax.random.split(key)

    # input x: [B, Cin, H, W] (NCHW, matching PyTorch)
    x = jax.random.normal(kx, (2, in_channels, 16, 16), dtype=jnp.float32)
    # filters ~ torch.randn(out_channels, in_channels, kh, kw)
    filters = jax.random.normal(
        kw, (out_channels, in_channels, *kernel_size), dtype=jnp.float32
    )

    ref = _reference_conv2d(x, filters, stride, padding)

    # f32 path — tight check
    fn32 = jax.jit(functools.partial(
        decomposed_conv2d, stride=stride, padding=padding))
    out32 = jax.block_until_ready(fn32(x, filters))
    assert out32.shape == ref.shape == (2, out_channels, 16, 16), out32.shape
    assert jnp.allclose(out32, ref, atol=1e-4, rtol=1e-4), \
        float(jnp.max(jnp.abs(out32 - ref)))

    # bf16-operand path (v6e/v7x bandwidth win, f32 accumulation) — loose check
    fnbf16 = jax.jit(functools.partial(
        decomposed_conv2d, stride=stride, padding=padding,
        compute_dtype=jnp.bfloat16))
    outbf = jax.block_until_ready(fnbf16(x, filters))
    assert outbf.shape == ref.shape, outbf.shape
    assert jnp.allclose(outbf, ref, atol=5e-1, rtol=5e-2), \
        float(jnp.max(jnp.abs(outbf - ref)))

    print("KERNEL_OK")
</pallas_src>

<mosaic_0001>
module attributes {stable_mosaic.version = 11 : i64} {
  func.func @_conv_shift_matmul_kernel(%arg0: i32, %arg1: memref<1x4x512xf32, #tpu.memory_space<vmem>>, %arg2: memref<9x6x4xf32, #tpu.memory_space<vmem>>, %arg3: memref<1x6x384xf32, #tpu.memory_space<vmem>>) attributes {dimension_semantics = [#tpu.dimension_semantics<parallel>], iteration_bounds = array<i64: 2>, scalar_prefetch = 0 : i64, scratch_operands = 0 : i64, tpu.core_type = #tpu.core_type<tc>, window_params = [{transform_indices = @transform_0, window_bounds = array<i64: 1, 4, 512>}, {pipeline_mode = #tpu.pipeline_mode<synchronous>, transform_indices = @transform_1, window_bounds = array<i64: 9, 6, 4>}, {transform_indices = @transform_2, window_bounds = array<i64: 1, 6, 384>}]} {
    %cst = arith.constant 0.000000e+00 : f32
    %0 = vector.broadcast %cst : f32 to vector<6x384xf32>
    %c0 = arith.constant 0 : index
    %c0_0 = arith.constant 0 : index
    %c0_1 = arith.constant 0 : index
    %1 = vector.load %arg1[%c0, %c0_0, %c0_1] : memref<1x4x512xf32, #tpu.memory_space<vmem>>, vector<1x4x384xf32>
    %2 = vector.shape_cast %1 : vector<1x4x384xf32> to vector<4x384xf32>
    %c0_2 = arith.constant 0 : index
    %c0_3 = arith.constant 0 : index
    %c0_4 = arith.constant 0 : index
    %3 = vector.load %arg2[%c0_2, %c0_3, %c0_4] : memref<9x6x4xf32, #tpu.memory_space<vmem>>, vector<1x6x4xf32>
    %4 = vector.shape_cast %3 : vector<1x6x4xf32> to vector<6x4xf32>
    %cst_5 = arith.constant dense<0.000000e+00> : vector<6x384xf32>
    %5 = tpu.matmul %4, %2, %cst_5 {dimension_numbers = #tpu.dot_dimension_numbers<[1], [0], [0], [1], [0, 0, 1, 1], [], []>} : vector<6x4xf32>, vector<4x384xf32>, vector<6x384xf32> -> vector<6x384xf32>
    %6 = arith.addf %0, %5 : vector<6x384xf32>
    %c0_6 = arith.constant 0 : index
    %c0_7 = arith.constant 0 : index
    %c1 = arith.constant 1 : index
    %7 = vector.load %arg1[%c0_6, %c0_7, %c1] : memref<1x4x512xf32, #tpu.memory_space<vmem>>, vector<1x4x384xf32>
    %8 = vector.shape_cast %7 : vector<1x4x384xf32> to vector<4x384xf32>
    %c1_8 = arith.constant 1 : index
    %c0_9 = arith.constant 0 : index
    %c0_10 = arith.constant 0 : index
    %9 = vector.load %arg2[%c1_8, %c0_9, %c0_10] : memref<9x6x4xf32, #tpu.memory_space<vmem>>, vector<1x6x4xf32>
    %10 = vector.shape_cast %9 : vector<1x6x4xf32> to vector<6x4xf32>
    %cst_11 = arith.constant dense<0.000000e+00> : vector<6x384xf32>
    %11 = tpu.matmul %10, %8, %cst_11 {dimension_numbers = #tpu.dot_dimension_numbers<[1], [0], [0], [1], [0, 0, 1, 1], [], []>} : vector<6x4xf32>, vector<4x384xf32>, vector<6x384xf32> -> vector<6x384xf32>
    %12 = arith.addf %6, %11 : vector<6x384xf32>
    %c0_12 = arith.constant 0 : index
    %c0_13 = arith.constant 0 : index
    %c2 = arith.constant 2 : index
    %13 = vector.load %arg1[%c0_12, %c0_13, %c2] : memref<1x4x512xf32, #tpu.memory_space<vmem>>, vector<1x4x384xf32>
    %14 = vector.shape_cast %13 : vector<1x4x384xf32> to vector<4x384xf32>
    %c2_14 = arith.constant 2 : index
    %c0_15 = arith.constant 0 : index
    %c0_16 = arith.constant 0 : index
    %15 = vector.load %arg2[%c2_14, %c0_15, %c0_16] : memref<9x6x4xf32, #tpu.memory_space<vmem>>, vector<1x6x4xf32>
    %16 = vector.shape_cast %15 : vector<1x6x4xf32> to vector<6x4xf32>
    %cst_17 = arith.constant dense<0.000000e+00> : vector<6x384xf32>
    %17 = tpu.matmul %16, %14, %cst_17 {dimension_numbers = #tpu.dot_dimension_numbers<[1], [0], [0], [1], [0, 0, 1, 1], [], []>} : vector<6x4xf32>, vector<4x384xf32>, vector<6x384xf32> -> vector<6x384xf32>
    %18 = arith.addf %12, %17 : vector<6x384xf32>
    %c0_18 = arith.constant 0 : index
    %c0_19 = arith.constant 0 : index
    %c18 = arith.constant 18 : index
    %19 = vector.load %arg1[%c0_18, %c0_19, %c18] : memref<1x4x512xf32, #tpu.memory_space<vmem>>, vector<1x4x384xf32>
    %20 = vector.shape_cast %19 : vector<1x4x384xf32> to vector<4x384xf32>
    %c3 = arith.constant 3 : index
    %c0_20 = arith.constant 0 : index
    %c0_21 = arith.constant 0 : index
    %21 = vector.load %arg2[%c3, %c0_20, %c0_21] : memref<9x6x4xf32, #tpu.memory_space<vmem>>, vector<1x6x4xf32>
    %22 = vector.shape_cast %21 : vector<1x6x4xf32> to vector<6x4xf32>
    %cst_22 = arith.constant dense<0.000000e+00> : vector<6x384xf32>
    %23 = tpu.matmul %22, %20, %cst_22 {dimension_numbers = #tpu.dot_dimension_numbers<[1], [0], [0], [1], [0, 0, 1, 1], [], []>} : vector<6x4xf32>, vector<4x384xf32>, vector<6x384xf32> -> vector<6x384xf32>
    %24 = arith.addf %18, %23 : vector<6x384xf32>
    %c0_23 = arith.constant 0 : index
    %c0_24 = arith.constant 0 : index
    %c19 = arith.constant 19 : index
    %25 = vector.load %arg1[%c0_23, %c0_24, %c19] : memref<1x4x512xf32, #tpu.memory_space<vmem>>, vector<1x4x384xf32>
    %26 = vector.shape_cast %25 : vector<1x4x384xf32> to vector<4x384xf32>
    %c4 = arith.constant 4 : index
    %c0_25 = arith.constant 0 : index
    %c0_26 = arith.constant 0 : index
    %27 = vector.load %arg2[%c4, %c0_25, %c0_26] : memref<9x6x4xf32, #tpu.memory_space<vmem>>, vector<1x6x4xf32>
    %28 = vector.shape_cast %27 : vector<1x6x4xf32> to vector<6x4xf32>
    %cst_27 = arith.constant dense<0.000000e+00> : vector<6x384xf32>
    %29 = tpu.matmul %28, %26, %cst_27 {dimension_numbers = #tpu.dot_dimension_numbers<[1], [0], [0], [1], [0, 0, 1, 1], [], []>} : vector<6x4xf32>, vector<4x384xf32>, vector<6x384xf32> -> vector<6x384xf32>
    %30 = arith.addf %24, %29 : vector<6x384xf32>
    %c0_28 = arith.constant 0 : index
    %c0_29 = arith.constant 0 : index
    %c20 = arith.constant 20 : index
    %31 = vector.load %arg1[%c0_28, %c0_29, %c20] : memref<1x4x512xf32, #tpu.memory_space<vmem>>, vector<1x4x384xf32>
    %32 = vector.shape_cast %31 : vector<1x4x384xf32> to vector<4x384xf32>
    %c5 = arith.constant 5 : index
    %c0_30 = arith.constant 0 : index
    %c0_31 = arith.constant 0 : index
    %33 = vector.load %arg2[%c5, %c0_30, %c0_31] : memref<9x6x4xf32, #tpu.memory_space<vmem>>, vector<1x6x4xf32>
    %34 = vector.shape_cast %33 : vector<1x6x4xf32> to vector<6x4xf32>
    %cst_32 = arith.constant dense<0.000000e+00> : vector<6x384xf32>
    %35 = tpu.matmul %34, %32, %cst_32 {dimension_numbers = #tpu.dot_dimension_numbers<[1], [0], [0], [1], [0, 0, 1, 1], [], []>} : vector<6x4xf32>, vector<4x384xf32>, vector<6x384xf32> -> vector<6x384xf32>
    %36 = arith.addf %30, %35 : vector<6x384xf32>
    %c0_33 = arith.constant 0 : index
    %c0_34 = arith.constant 0 : index
    %c36 = arith.constant 36 : index
    %37 = vector.load %arg1[%c0_33, %c0_34, %c36] : memref<1x4x512xf32, #tpu.memory_space<vmem>>, vector<1x4x384xf32>
    %38 = vector.shape_cast %37 : vector<1x4x384xf32> to vector<4x384xf32>
    %c6 = arith.constant 6 : index
    %c0_35 = arith.constant 0 : index
    %c0_36 = arith.constant 0 : index
    %39 = vector.load %arg2[%c6, %c0_35, %c0_36] : memref<9x6x4xf32, #tpu.memory_space<vmem>>, vector<1x6x4xf32>
    %40 = vector.shape_cast %39 : vector<1x6x4xf32> to vector<6x4xf32>
    %cst_37 = arith.constant dense<0.000000e+00> : vector<6x384xf32>
    %41 = tpu.matmul %40, %38, %cst_37 {dimension_numbers = #tpu.dot_dimension_numbers<[1], [0], [0], [1], [0, 0, 1, 1], [], []>} : vector<6x4xf32>, vector<4x384xf32>, vector<6x384xf32> -> vector<6x384xf32>
    %42 = arith.addf %36, %41 : vector<6x384xf32>
    %c0_38 = arith.constant 0 : index
    %c0_39 = arith.constant 0 : index
    %c37 = arith.constant 37 : index
    %43 = vector.load %arg1[%c0_38, %c0_39, %c37] : memref<1x4x512xf32, #tpu.memory_space<vmem>>, vector<1x4x384xf32>
    %44 = vector.shape_cast %43 : vector<1x4x384xf32> to vector<4x384xf32>
    %c7 = arith.constant 7 : index
    %c0_40 = arith.constant 0 : index
    %c0_41 = arith.constant 0 : index
    %45 = vector.load %arg2[%c7, %c0_40, %c0_41] : memref<9x6x4xf32, #tpu.memory_space<vmem>>, vector<1x6x4xf32>
    %46 = vector.shape_cast %45 : vector<1x6x4xf32> to vector<6x4xf32>
    %cst_42 = arith.constant dense<0.000000e+00> : vector<6x384xf32>
    %47 = tpu.matmul %46, %44, %cst_42 {dimension_numbers = #tpu.dot_dimension_numbers<[1], [0], [0], [1], [0, 0, 1, 1], [], []>} : vector<6x4xf32>, vector<4x384xf32>, vector<6x384xf32> -> vector<6x384xf32>
    %48 = arith.addf %42, %47 : vector<6x384xf32>
    %c0_43 = arith.constant 0 : index
    %c0_44 = arith.constant 0 : index
    %c38 = arith.constant 38 : index
    %49 = vector.load %arg1[%c0_43, %c0_44, %c38] : memref<1x4x512xf32, #tpu.memory_space<vmem>>, vector<1x4x384xf32>
    %50 = vector.shape_cast %49 : vector<1x4x384xf32> to vector<4x384xf32>
    %c8 = arith.constant 8 : index
    %c0_45 = arith.constant 0 : index
    %c0_46 = arith.constant 0 : index
    %51 = vector.load %arg2[%c8, %c0_45, %c0_46] : memref<9x6x4xf32, #tpu.memory_space<vmem>>, vector<1x6x4xf32>
    %52 = vector.shape_cast %51 : vector<1x6x4xf32> to vector<6x4xf32>
    %cst_47 = arith.constant dense<0.000000e+00> : vector<6x384xf32>
    %53 = tpu.matmul %52, %50, %cst_47 {dimension_numbers = #tpu.dot_dimension_numbers<[1], [0], [0], [1], [0, 0, 1, 1], [], []>} : vector<6x4xf32>, vector<4x384xf32>, vector<6x384xf32> -> vector<6x384xf32>
    %54 = arith.addf %48, %53 : vector<6x384xf32>
    %c0_48 = arith.constant 0 : index
    %c0_49 = arith.constant 0 : index
    %c0_50 = arith.constant 0 : index
    %55 = vector.load %arg3[%c0_48, %c0_49, %c0_50] : memref<1x6x384xf32, #tpu.memory_space<vmem>>, vector<1x6x384xf32>
    %56 = vector.shape_cast %55 : vector<1x6x384xf32> to vector<6x384xf32>
    %57 = vector.shape_cast %54 : vector<6x384xf32> to vector<1x6x384xf32>
    tpu.vector_store %arg3[%c0_48, %c0_49, %c0_50], %57 {strides = array<i32>} : memref<1x6x384xf32, #tpu.memory_space<vmem>>, vector<1x6x384xf32>,
    return
  }
  func.func @transform_0(%arg0: i32) -> (i32, i32, i32) {
    %c0_i32 = arith.constant 0 : i32
    %c0_i32_0 = arith.constant 0 : i32
    %c0_i32_1 = arith.constant 0 : i32
    return %arg0, %c0_i32, %c0_i32_0 : i32, i32, i32
  }
  func.func @transform_1(%arg0: i32) -> (i32, i32, i32) {
    %c0_i32 = arith.constant 0 : i32
    %c0_i32_0 = arith.constant 0 : i32
    %c0_i32_1 = arith.constant 0 : i32
    %c0_i32_2 = arith.constant 0 : i32
    return %c0_i32, %c0_i32_0, %c0_i32_1 : i32, i32, i32
  }
  func.func @transform_2(%arg0: i32) -> (i32, i32, i32) {
    %c0_i32 = arith.constant 0 : i32
    %c0_i32_0 = arith.constant 0 : i32
    %c0_i32_1 = arith.constant 0 : i32
    return %arg0, %c0_i32, %c0_i32_0 : i32, i32, i32
  }
}

</mosaic_0001>

<llo_original>
// kernel: decomposed_conv2d.1
$region0: #{decomposed_conv2d.1}
  #allocation0 [shape = 'u32[]', space=smem, size = 0x4, offset = 0x4, fixed_abs, tag = 'smem constant byte address 0x4 - core index']
  #allocation1 [shape = 'u32[144,128]{1,0:T(1,128)}', space=vmem, size = 0x12000, scoped, tag = 'internal scratch']
  %s0 = inlined_call_operand.vmem [shape: f32[2,4,512], index: 0, kind: input, shape index: {}]
  %s1 = inlined_call_operand.vmem [shape: f32[9,6,4], index: 1, kind: input, shape index: {}]
  %s2 = inlined_call_operand.vmem [shape: f32[2,6,384], index: 2, kind: output, shape index: {}]
  %s3 = sld [smem:[#allocation0]]
  $region41: #{decomposed_conv2d.1} parent=0
    _
  %s5 = ssub.s32 1, %s3
  %s6 = scalar_select 0, %s5, %s3
  loop: start=0, step=1, limit=4
  $region2: #{decomposed_conv2d.1} parent=0 // loop_pre_header
    _
  $region3: #{decomposed_conv2d.1} parent=0 // loop_header
    %s8 = sphi 0, %s12
    %p9 = scmp.ge.s32.totalorder %s8, 4
    %s18 = sphi 0, %s20
    %s21 = sphi 0, %s18
    %s22 = sphi 0, %s21
    %s38 = sphi 0, %s22
    %s42 = sphi 0, %s42
    %s44 = sphi 0, %s42
    %s45 = sphi 0, %s44
    %s59 = sphi 0, %s45
    %s65 = sphi 0, %s67
    %s68 = sphi 0, %s65
    %s69 = sphi 0, %s68
    %s85 = sphi 0, %s69
  $region4: #{decomposed_conv2d.1} parent=0 // loop_header_branch
    %11 = sbr.rel (%p9) target = $region8
  $region5: #{decomposed_conv2d.1} parent=0 // loop_body
    %s13 = ssub.s32 %s8, 1
    %s14 = ssub.s32 %s8, 2
    %s15 = sadd.s32 %s8, 1
    %s16 = ssub.s32 %s8, %s15
    %p17 = scmp.eq.s32.totalorder %s16, 0
    %s19 = sadd.s32 %s18, 1
    %s20 = scalar_select %p17, %s18, %s19
    %p23 = pneg %p17
    %p24 = scmp.eq.s32.totalorder %s8, 1
    %p25 = por %p23, %p24
    %p26 = scmp.ne.s32.totalorder %s18, %s21
    %p27 = scmp.eq.s32.totalorder %s8, 0
    %p28 = por %p26, %p27
    %p29 = scmp.ne.s32.totalorder %s18, %s21
    %p30 = scmp.eq.s32.totalorder %s13, 1
    %p31 = por %p29, %p30
    %p32 = scmp.ne.s32.totalorder %s21, %s22
    %p33 = scmp.eq.s32.totalorder %s13, 0
    %p34 = por %p32, %p33
    %p35 = scmp.ne.s32.totalorder %s21, %s22
    %p36 = scmp.eq.s32.totalorder %s14, 1
    %p37 = por %p35, %p36
    %p39 = scmp.ne.s32.totalorder %s22, %s38
    %p40 = scmp.eq.s32.totalorder %s14, 0
    %p41 = por %p39, %p40
    %s43 = sadd.s32 %s42, 1
    %p46 = scmp.eq.s32.totalorder %s8, 1
    %p47 = scmp.ne.s32.totalorder %s42, %s44
    %p48 = scmp.eq.s32.totalorder %s8, 0
    %p49 = por %p47, %p48
    %p50 = scmp.ne.s32.totalorder %s42, %s44
    %p51 = scmp.eq.s32.totalorder %s13, 1
    %p52 = por %p50, %p51
    %p53 = scmp.ne.s32.totalorder %s44, %s45
    %p54 = scmp.eq.s32.totalorder %s13, 0
    %p55 = por %p53, %p54
    %p56 = scmp.ne.s32.totalorder %s44, %s45
    %p57 = scmp.eq.s32.totalorder %s14, 1
    %p58 = por %p56, %p57
    %p60 = scmp.ne.s32.totalorder %s45, %s59
    %p61 = scmp.eq.s32.totalorder %s14, 0
    %p62 = por %p60, %p61
    %s63 = ssub.s32 %s8, %s15
    %p64 = scmp.eq.s32.totalorder %s63, 0
    %s66 = sadd.s32 %s65, 1
    %s67 = scalar_select %p64, %s65, %s66
    %p70 = pneg %p64
    %p71 = scmp.eq.s32.totalorder %s8, 1
    %p72 = por %p70, %p71
    %p73 = scmp.ne.s32.totalorder %s65, %s68
    %p74 = scmp.eq.s32.totalorder %s8, 0
    %p75 = por %p73, %p74
    %p76 = scmp.ne.s32.totalorder %s65, %s68
    %p77 = scmp.eq.s32.totalorder %s13, 1
    %p78 = por %p76, %p77
    %p79 = scmp.ne.s32.totalorder %s68, %s69
    %p80 = scmp.eq.s32.totalorder %s13, 0
    %p81 = por %p79, %p80
    %p82 = scmp.ne.s32.totalorder %s68, %s69
    %p83 = scmp.eq.s32.totalorder %s14, 1
    %p84 = por %p82, %p83
    %p86 = scmp.ne.s32.totalorder %s69, %s85
    %p87 = scmp.eq.s32.totalorder %s14, 0
    %p88 = por %p86, %p87
    %p89 = scmp.le.s32.totalorder 1, %s8
    %p90 = scmp.lt.s32.totalorder %s8, 3
    %p91 = pnand %p89, %p90
    %p92 = pneg %p91
    // Predicated region
    $region9: #{decomposed_conv2d.1} parent=5 // pred_check
      _
    $region10: #{decomposed_conv2d.1} parent=5 // pred_check_branch
      %94 = sbr.rel (%p91) target = $region12
    $region11: #{decomposed_conv2d.1} parent=5 // pred_region
      %s95 = ssub.s32 %s8, 1
      // Predicated region
      $region13: #{decomposed_conv2d.1} parent=11 // pred_check
        %p96 = pneg %p55
      $region14: #{decomposed_conv2d.1} parent=11 // pred_check_branch
        %98 = sbr.rel (%p96) target = $region16
      $region15: #{decomposed_conv2d.1} parent=11 // pred_region
        _
      $region16: #{decomposed_conv2d.1} parent=11 // pred_fallthru
        _
    $region12: #{decomposed_conv2d.1} parent=5 // pred_fallthru
      _
    %p99 = scmp.lt.s32.totalorder %s8, 2
    // Predicated region
    $region17: #{decomposed_conv2d.1} parent=5 // pred_check
      %p100 = pneg %p99
    $region18: #{decomposed_conv2d.1} parent=5 // pred_check_branch
      %102 = sbr.rel (%p100) target = $region20
    $region19: #{decomposed_conv2d.1} parent=5 // pred_region
      // Predicated region
      $region21: #{decomposed_conv2d.1} parent=19 // pred_check
        %p103 = pneg %p28
      $region22: #{decomposed_conv2d.1} parent=19 // pred_check_branch
        %105 = sbr.rel (%p103) target = $region24
      $region23: #{decomposed_conv2d.1} parent=19 // pred_region
        %p106 = scmp.lt.s32.totalorder %s8, 1
        %s107 = scalar_select %p106, %s8, 1
        %s108 = smul.addr %s107, 4
        %s109 = smul.addr %s108, 4
        %s110 = scalar_lea.vmem %s0, %s109
      $region24: #{decomposed_conv2d.1} parent=19 // pred_fallthru
        _
    $region20: #{decomposed_conv2d.1} parent=5 // pred_fallthru
      _
    %p111 = scmp.le.s32.totalorder 1, %s8
    %p112 = scmp.lt.s32.totalorder %s8, 3
    %p113 = pnand %p111, %p112
    %p114 = pneg %p113
    // Predicated region
    $region25: #{decomposed_conv2d.1} parent=5 // pred_check
      _
    $region26: #{decomposed_conv2d.1} parent=5 // pred_check_branch
      %116 = sbr.rel (%p113) target = $region28
    $region27: #{decomposed_conv2d.1} parent=5 // pred_region
      %s117 = ssub.s32 %s8, 1
      %p118 = scmp.lt.s32.totalorder %s13, 1
      %s119 = scalar_select %p118, %s13, 1
      %s120 = smul.addr %s119, 4
      %s121 = smul.addr %s120, 4
      %s122 = scalar_lea.vmem %s0, %s121
      %p123 = pneg %p34
      %p124 = pneg %p31
      %p125 = pneg %p55
      %p126 = pneg %p52
      %p127 = pneg %p81
      %p128 = pneg %p78
      %p129 = scmp.lt.s32.totalorder %s13, 1
      %s130 = scalar_select %p129, %s13, 1
      %s131 = smul.addr %s130, 3
      %s132 = smul.addr %s131, 8
      %s133 = scalar_lea.vmem %s2, %s132
      %p134 = scmp.lt.s32.totalorder %s13, 1
      %s135 = scalar_select %p134, %s13, 1
      %s136 = smul.addr %s135, 4
      %s137 = smul.addr %s136, 4
      %s138 = scalar_lea.vmem %s0, %s137
      %p139 = scmp.lt.s32.totalorder %s13, 1
      %s140 = scalar_select %p139, %s13, 1
      %s141 = smul.addr %s140, 3
      %s142 = smul.addr %s141, 8
      %s143 = scalar_lea.vmem %s2, %s142
      %v144 = vld [vmem:[%s138] sm:$0xff]
      %v145 = vld [vmem:[%s138 + $0x8] sm:$0xf]
      %v146 = vld [vmem:[%s1] sm:$0x3f]
      %v147 = vld [vmem:[%s138] sm:$0xff]
      %v148 = vld [vmem:[%s138 + $0x8] sm:$0xff]
      %s149 = scalar_lea.vmem %s1, 8
      %v150 = vld [vmem:[%s149] sm:$0x3f]
      %v153 = vcombine.high %v147, %v147
      %v154 = vcombine.high %v148, %v148
      %155 = vrot.lane.b32.xlu0 %v147, 127
      %v156 = vpop.permute.xlu0 %155
      %157 = vrot.lane.b32.xlu0 %v153, 127
      %v158 = vpop.permute.xlu0 %157
      %159 = vrot.lane.b32.xlu0 %v148, 127
      %v160 = vpop.permute.xlu0 %159
      %161 = vrot.lane.b32.xlu0 %v154, 127
      %v162 = vpop.permute.xlu0 %161
      %vm163 = vcmask 1039360
      %v164 = vsel %vm163, %v156, %v158
      %v165 = vsel %vm163, %v158, %v160
      %v166 = vsel %vm163, %v160, %v162
      %vm167 = vcmask 31744
      %v169 = vsel %vm167, %v150, 0
      %vm171 = vcmask 1043456
      %v172 = vsel %vm171, %v164, 0
      %v174 = vsel %vm171, %v165, 0
      %v176 = vsel %vm171, %v166, 0
      %178 = vmatprep.subr.mxu0 %v174
      %179 = vmatpush1.msra.mxu0 %v172
      %180 = vmatprep.subr.mxu0 0.0
      %181 = vmatpush1.msra.mxu0 0.0
      %182 = vmatprep.subr.mxu0 0.0
      %183 = vmatpush1.msra.mxu0 0.0
      %184 = vmatprep.subr.mxu0 0.0
      %185 = vmatpush1.msra.mxu0 0.0
      %186 = vmatprep.subr.mxu0 0.0
      %187 = vmatpush1.msra.mxu0 0.0
      %188 = vmatprep.subr.mxu0 0.0
      %189 = vmatpush1.msra.mxu0 0.0
      %190 = vmatprep.subr.mxu0 0.0
      %191 = vmatpush1.msra.mxu0 0.0
      %192 = vmatprep.subr.mxu0 0.0
      %193 = vmatpush1.msra.mxu0 0.0
      %194 = vmatprep.subr.mxu0 0.0
      %195 = vmatpush1.msra.mxu0 0.0
      %196 = vmatprep.subr.mxu0 0.0
      %197 = vmatpush1.msra.mxu0 0.0
      %198 = vmatprep.subr.mxu0 0.0
      %199 = vmatpush1.msra.mxu0 0.0
      %200 = vmatprep.subr.mxu0 0.0
      %201 = vmatpush1.msra.mxu0 0.0
      %202 = vmatprep.subr.mxu0 0.0
      %203 = vmatpush1.msra.mxu0 0.0
      %204 = vmatprep.subr.mxu0 0.0
      %205 = vmatpush1.msra.mxu0 0.0
      %206 = vmatprep.subr.mxu0 0.0
      %207 = vmatpush1.msra.mxu0 0.0
      %208 = vmatprep.subr.mxu0 0.0
      %209 = vmatpush1.msra.mxu0 0.0
      %210 = vmatprep.subr.mxu0 0.0
      %211 = vmatpush1.msra.mxu0 0.0
      %212 = vmatprep.subr.mxu0 0.0
      %213 = vmatpush1.msra.mxu0 0.0
      %214 = vmatprep.subr.mxu0 0.0
      %215 = vmatpush1.msra.mxu0 0.0
      %216 = vmatprep.subr.mxu0 0.0
      %217 = vmatpush1.msra.mxu0 0.0
      %218 = vmatprep.subr.mxu0 0.0
      %219 = vmatpush1.msra.mxu0 0.0
      %220 = vmatprep.subr.mxu0 0.0
      %221 = vmatpush1.msra.mxu0 0.0
      %222 = vmatprep.subr.mxu0 0.0
      %223 = vmatpush1.msra.mxu0 0.0
      %224 = vmatprep.subr.mxu0 0.0
      %225 = vmatpush1.msra.mxu0 0.0
      %226 = vmatprep.subr.mxu0 0.0
      %227 = vmatpush1.msra.mxu0 0.0
      %228 = vmatprep.subr.mxu0 0.0
      %229 = vmatpush1.msra.mxu0 0.0
      %230 = vmatprep.subr.mxu0 0.0
      %231 = vmatpush1.msra.mxu0 0.0
      %232 = vmatprep.subr.mxu0 0.0
      %233 = vmatpush1.msra.mxu0 0.0
      %234 = vmatprep.subr.mxu0 0.0
      %235 = vmatpush1.msra.mxu0 0.0
      %236 = vmatprep.subr.mxu0 0.0
      %237 = vmatpush1.msra.mxu0 0.0
      %238 = vmatprep.subr.mxu0 0.0
      %239 = vmatpush1.msra.mxu0 0.0
      %240 = vmatprep.subr.mxu0 0.0
      %241 = vmatpush1.msra.mxu0 0.0
      %242 = vmatprep.mubr.f32.mxu0 0.0
      %243 = vmatmul.mubr.f32.gmra.mrb[0].mxu0 %v169
      %v244 = vpop.f32.mrb[0].mxu0
      %v245 = vadd.f32 0.0, %v244
      %v246 = vpop.f32.mrb[0].mxu0
      %v247 = vadd.f32 0.0, %v246
      %248 = vdwg.mxu0
      %249 = vmatprep.subr.mxu0 0.0
      %250 = vmatpush1.msra.mxu0 %v176
      %251 = vmatprep.subr.mxu0 0.0
      %252 = vmatpush1.msra.mxu0 0.0
      %253 = vmatprep.subr.mxu0 0.0
      %254 = vmatpush1.msra.mxu0 0.0
      %255 = vmatprep.subr.mxu0 0.0
      %256 = vmatpush1.msra.mxu0 0.0
      %257 = vmatprep.subr.mxu0 0.0
      %258 = vmatpush1.msra.mxu0 0.0
      %259 = vmatprep.subr.mxu0 0.0
      %260 = vmatpush1.msra.mxu0 0.0
      %261 = vmatprep.subr.mxu0 0.0
      %262 = vmatpush1.msra.mxu0 0.0
      %263 = vmatprep.subr.mxu0 0.0
      %264 = vmatpush1.msra.mxu0 0.0
      %265 = vmatprep.subr.mxu0 0.0
      %266 = vmatpush1.msra.mxu0 0.0
      %267 = vmatprep.subr.mxu0 0.0
      %268 = vmatpush1.msra.mxu0 0.0
      %269 = vmatprep.subr.mxu0 0.0
      %270 = vmatpush1.msra.mxu0 0.0
      %271 = vmatprep.subr.mxu0 0.0
      %272 = vmatpush1.msra.mxu0 0.0
      %273 = vmatprep.subr.mxu0 0.0
      %274 = vmatpush1.msra.mxu0 0.0
      %275 = vmatprep.subr.mxu0 0.0
      %276 = vmatpush1.msra.mxu0 0.0
      %277 = vmatprep.subr.mxu0 0.0
      %278 = vmatpush1.msra.mxu0 0.0
      %279 = vmatprep.subr.mxu0 0.0
      %280 = vmatpush1.msra.mxu0 0.0
      %281 = vmatprep.subr.mxu0 0.0
      %282 = vmatpush1.msra.mxu0 0.0
      %283 = vmatprep.subr.mxu0 0.0
      %284 = vmatpush1.msra.mxu0 0.0
      %285 = vmatprep.subr.mxu0 0.0
      %286 = vmatpush1.msra.mxu0 0.0
      %287 = vmatprep.subr.mxu0 0.0
      %288 = vmatpush1.msra.mxu0 0.0
      %289 = vmatprep.subr.mxu0 0.0
      %290 = vmatpush1.msra.mxu0 0.0
      %291 = vmatprep.subr.mxu0 0.0
      %292 = vmatpush1.msra.mxu0 0.0
      %293 = vmatprep.subr.mxu0 0.0
      %294 = vmatpush1.msra.mxu0 0.0
      %295 = vmatprep.subr.mxu0 0.0
      %296 = vmatpush1.msra.mxu0 0.0
      %297 = vmatprep.subr.mxu0 0.0
      %298 = vmatpush1.msra.mxu0 0.0
      %299 = vmatprep.subr.mxu0 0.0
      %300 = vmatpush1.msra.mxu0 0.0
      %301 = vmatprep.subr.mxu0 0.0
      %302 = vmatpush1.msra.mxu0 0.0
      %303 = vmatprep.subr.mxu0 0.0
      %304 = vmatpush1.msra.mxu0 0.0
      %305 = vmatprep.subr.mxu0 0.0
      %306 = vmatpush1.msra.mxu0 0.0
      %307 = vmatprep.subr.mxu0 0.0
      %308 = vmatpush1.msra.mxu0 0.0
      %309 = vmatprep.subr.mxu0 0.0
      %310 = vmatpush1.msra.mxu0 0.0
      %311 = vmatprep.subr.mxu0 0.0
      %312 = vmatpush1.msra.mxu0 0.0
      %313 = vmatprep.mubr.f32.mxu0 0.0
      %314 = vmatmul.mubr.f32.gmra.mrb[0].mxu0 %v169
      %v315 = vpop.f32.mrb[0].mxu0
      %v316 = vadd.f32 0.0, %v315
      %v317 = vpop.f32.mrb[0].mxu0
      %318 = vdwg.mxu0
      %v321 = vcombine.high %v144, %v144
      %v323 = vsel %vm167, %v146, 0
      %v325 = vsel %vm171, %v144, 0
      %v327 = vsel %vm171, %v321, 0
      %v329 = vsel %vm171, %v145, 0
      %331 = vmatprep.subr.mxu0 %v327
      %332 = vmatpush1.msra.mxu0 %v325
      %333 = vmatprep.subr.mxu0 0.0
      %334 = vmatpush1.msra.mxu0 0.0
      %335 = vmatprep.subr.mxu0 0.0
      %336 = vmatpush1.msra.mxu0 0.0
      %337 = vmatprep.subr.mxu0 0.0
      %338 = vmatpush1.msra.mxu0 0.0
      %339 = vmatprep.subr.mxu0 0.0
      %340 = vmatpush1.msra.mxu0 0.0
      %341 = vmatprep.subr.mxu0 0.0
      %342 = vmatpush1.msra.mxu0 0.0
      %343 = vmatprep.subr.mxu0 0.0
      %344 = vmatpush1.msra.mxu0 0.0
      %345 = vmatprep.subr.mxu0 0.0
      %346 = vmatpush1.msra.mxu0 0.0
      %347 = vmatprep.subr.mxu0 0.0
      %348 = vmatpush1.msra.mxu0 0.0
      %349 = vmatprep.subr.mxu0 0.0
      %350 = vmatpush1.msra.mxu0 0.0
      %351 = vmatprep.subr.mxu0 0.0
      %352 = vmatpush1.msra.mxu0 0.0
      %353 = vmatprep.subr.mxu0 0.0
      %354 = vmatpush1.msra.mxu0 0.0
      %355 = vmatprep.subr.mxu0 0.0
      %356 = vmatpush1.msra.mxu0 0.0
      %357 = vmatprep.subr.mxu0 0.0
      %358 = vmatpush1.msra.mxu0 0.0
      %359 = vmatprep.subr.mxu0 0.0
      %360 = vmatpush1.msra.mxu0 0.0
      %361 = vmatprep.subr.mxu0 0.0
      %362 = vmatpush1.msra.mxu0 0.0
      %363 = vmatprep.subr.mxu0 0.0
      %364 = vmatpush1.msra.mxu0 0.0
      %365 = vmatprep.subr.mxu0 0.0
      %366 = vmatpush1.msra.mxu0 0.0
      %367 = vmatprep.subr.mxu0 0.0
      %368 = vmatpush1.msra.mxu0 0.0
      %369 = vmatprep.subr.mxu0 0.0
      %370 = vmatpush1.msra.mxu0 0.0
      %371 = vmatprep.subr.mxu0 0.0
      %372 = vmatpush1.msra.mxu0 0.0
      %373 = vmatprep.subr.mxu0 0.0
      %374 = vmatpush1.msra.mxu0 0.0
      %375 = vmatprep.subr.mxu0 0.0
      %376 = vmatpush1.msra.mxu0 0.0
      %377 = vmatprep.subr.mxu0 0.0
      %378 = vmatpush1.msra.mxu0 0.0
      %379 = vmatprep.subr.mxu0 0.0
      %380 = vmatpush1.msra.mxu0 0.0
      %381 = vmatprep.subr.mxu0 0.0
      %382 = vmatpush1.msra.mxu0 0.0
      %383 = vmatprep.subr.mxu0 0.0
      %384 = vmatpush1.msra.mxu0 0.0
      %385 = vmatprep.subr.mxu0 0.0
      %386 = vmatpush1.msra.mxu0 0.0
      %387 = vmatprep.subr.mxu0 0.0
      %388 = vmatpush1.msra.mxu0 0.0
      %389 = vmatprep.subr.mxu0 0.0
      %390 = vmatpush1.msra.mxu0 0.0
      %391 = vmatprep.subr.mxu0 0.0
      %392 = vmatpush1.msra.mxu0 0.0
      %393 = vmatprep.subr.mxu0 0.0
      %394 = vmatpush1.msra.mxu0 0.0
      %395 = vmatprep.mubr.f32.mxu0 0.0
      %396 = vmatmul.mubr.f32.gmra.mrb[0].mxu0 %v323
      %v397 = vpop.f32.mrb[0].mxu0
      %v398 = vadd.f32 %v245, %v397
      %v399 = vpop.f32.mrb[0].mxu0
      %v400 = vadd.f32 %v247, %v399
      %401 = vdwg.mxu0
      %402 = vmatprep.subr.mxu0 0.0
      %403 = vmatpush1.msra.mxu0 %v329
      %404 = vmatprep.subr.mxu0 0.0
      %405 = vmatpush1.msra.mxu0 0.0
      %406 = vmatprep.subr.mxu0 0.0
      %407 = vmatpush1.msra.mxu0 0.0
      %408 = vmatprep.subr.mxu0 0.0
      %409 = vmatpush1.msra.mxu0 0.0
      %410 = vmatprep.subr.mxu0 0.0
      %411 = vmatpush1.msra.mxu0 0.0
      %412 = vmatprep.subr.mxu0 0.0
      %413 = vmatpush1.msra.mxu0 0.0
      %414 = vmatprep.subr.mxu0 0.0
      %415 = vmatpush1.msra.mxu0 0.0
      %416 = vmatprep.subr.mxu0 0.0
      %417 = vmatpush1.msra.mxu0 0.0
      %418 = vmatprep.subr.mxu0 0.0
      %419 = vmatpush1.msra.mxu0 0.0
      %420 = vmatprep.subr.mxu0 0.0
      %421 = vmatpush1.msra.mxu0 0.0
      %422 = vmatprep.subr.mxu0 0.0
      %423 = vmatpush1.msra.mxu0 0.0
      %424 = vmatprep.subr.mxu0 0.0
      %425 = vmatpush1.msra.mxu0 0.0
      %426 = vmatprep.subr.mxu0 0.0
      %427 = vmatpush1.msra.mxu0 0.0
      %428 = vmatprep.subr.mxu0 0.0
      %429 = vmatpush1.msra.mxu0 0.0
      %430 = vmatprep.subr.mxu0 0.0
      %431 = vmatpush1.msra.mxu0 0.0
      %432 = vmatprep.subr.mxu0 0.0
      %433 = vmatpush1.msra.mxu0 0.0
      %434 = vmatprep.subr.mxu0 0.0
      %435 = vmatpush1.msra.mxu0 0.0
      %436 = vmatprep.subr.mxu0 0.0
      %437 = vmatpush1.msra.mxu0 0.0
      %438 = vmatprep.subr.mxu0 0.0
      %439 = vmatpush1.msra.mxu0 0.0
      %440 = vmatprep.subr.mxu0 0.0
      %441 = vmatpush1.msra.mxu0 0.0
      %442 = vmatprep.subr.mxu0 0.0
      %443 = vmatpush1.msra.mxu0 0.0
      %444 = vmatprep.subr.mxu0 0.0
      %445 = vmatpush1.msra.mxu0 0.0
      %446 = vmatprep.subr.mxu0 0.0
      %447 = vmatpush1.msra.mxu0 0.0
      %448 = vmatprep.subr.mxu0 0.0
      %449 = vmatpush1.msra.mxu0 0.0
      %450 = vmatprep.subr.mxu0 0.0
      %451 = vmatpush1.msra.mxu0 0.0
      %452 = vmatprep.subr.mxu0 0.0
      %453 = vmatpush1.msra.mxu0 0.0
      %454 = vmatprep.subr.mxu0 0.0
      %455 = vmatpush1.msra.mxu0 0.0
      %456 = vmatprep.subr.mxu0 0.0
      %457 = vmatpush1.msra.mxu0 0.0
      %458 = vmatprep.subr.mxu0 0.0
      %459 = vmatpush1.msra.mxu0 0.0
      %460 = vmatprep.subr.mxu0 0.0
      %461 = vmatpush1.msra.mxu0 0.0
      %462 = vmatprep.subr.mxu0 0.0
      %463 = vmatpush1.msra.mxu0 0.0
      %464 = vmatprep.subr.mxu0 0.0
      %465 = vmatpush1.msra.mxu0 0.0
      %466 = vmatprep.mubr.f32.mxu0 0.0
      %467 = vmatmul.mubr.f32.gmra.mrb[0].mxu0 %v323
      %v468 = vpop.f32.mrb[0].mxu0
      %v469 = vadd.f32 %v316, %v468
      %v470 = vpop.f32.mrb[0].mxu0
      %471 = vdwg.mxu0
      %v472 = vld [vmem:[%s138] sm:$0xff]
      %v473 = vld [vmem:[%s138 + $0x8] sm:$0xff]
      %s474 = scalar_lea.vmem %s1, 16
      %v475 = vld [vmem:[%s474] sm:$0x3f]
      %v478 = vcombine.high %v472, %v472
      %v479 = vcombine.high %v473, %v473
      %480 = vrot.lane.b32.xlu0 %v472, 126
      %v481 = vpop.permute.xlu0 %480
      %482 = vrot.lane.b32.xlu0 %v478, 126
      %v483 = vpop.permute.xlu0 %482
      %484 = vrot.lane.b32.xlu0 %v473, 126
      %v485 = vpop.permute.xlu0 %484
      %486 = vrot.lane.b32.xlu0 %v479, 126
      %v487 = vpop.permute.xlu0 %486
      %vm488 = vcmask 1031168
      %v489 = vsel %vm488, %v481, %v483
      %v490 = vsel %vm488, %v483, %v485
      %v491 = vsel %vm488, %v485, %v487
      %v493 = vsel %vm167, %v475, 0
      %v495 = vsel %vm171, %v489, 0
      %v497 = vsel %vm171, %v490, 0
      %v499 = vsel %vm171, %v491, 0
      %501 = vmatprep.subr.mxu0 %v497
      %502 = vmatpush1.msra.mxu0 %v495
      %503 = vmatprep.subr.mxu0 0.0
      %504 = vmatpush1.msra.mxu0 0.0
      %505 = vmatprep.subr.mxu0 0.0
      %506 = vmatpush1.msra.mxu0 0.0
      %507 = vmatprep.subr.mxu0 0.0
      %508 = vmatpush1.msra.mxu0 0.0
      %509 = vmatprep.subr.mxu0 0.0
      %510 = vmatpush1.msra.mxu0 0.0
      %511 = vmatprep.subr.mxu0 0.0
      %512 = vmatpush1.msra.mxu0 0.0
      %513 = vmatprep.subr.mxu0 0.0
      %514 = vmatpush1.msra.mxu0 0.0
      %515 = vmatprep.subr.mxu0 0.0
      %516 = vmatpush1.msra.mxu0 0.0
      %517 = vmatprep.subr.mxu0 0.0
      %518 = vmatpush1.msra.mxu0 0.0
      %519 = vmatprep.subr.mxu0 0.0
      %520 = vmatpush1.msra.mxu0 0.0
      %521 = vmatprep.subr.mxu0 0.0
      %522 = vmatpush1.msra.mxu0 0.0
      %523 = vmatprep.subr.mxu0 0.0
      %524 = vmatpush1.msra.mxu0 0.0
      %525 = vmatprep.subr.mxu0 0.0
      %526 = vmatpush1.msra.mxu0 0.0
      %527 = vmatprep.subr.mxu0 0.0
      %528 = vmatpush1.msra.mxu0 0.0
      %529 = vmatprep.subr.mxu0 0.0
      %530 = vmatpush1.msra.mxu0 0.0
      %531 = vmatprep.subr.mxu0 0.0
      %532 = vmatpush1.msra.mxu0 0.0
      %533 = vmatprep.subr.mxu0 0.0
      %534 = vmatpush1.msra.mxu0 0.0
      %535 = vmatprep.subr.mxu0 0.0
      %536 = vmatpush1.msra.mxu0 0.0
      %537 = vmatprep.subr.mxu0 0.0
      %538 = vmatpush1.msra.mxu0 0.0
      %539 = vmatprep.subr.mxu0 0.0
      %540 = vmatpush1.msra.mxu0 0.0
      %541 = vmatprep.subr.mxu0 0.0
      %542 = vmatpush1.msra.mxu0 0.0
      %543 = vmatprep.subr.mxu0 0.0
      %544 = vmatpush1.msra.mxu0 0.0
      %545 = vmatprep.subr.mxu0 0.0
      %546 = vmatpush1.msra.mxu0 0.0
      %547 = vmatprep.subr.mxu0 0.0
      %548 = vmatpush1.msra.mxu0 0.0
      %549 = vmatprep.subr.mxu0 0.0
      %550 = vmatpush1.msra.mxu0 0.0
      %551 = vmatprep.subr.mxu0 0.0
      %552 = vmatpush1.msra.mxu0 0.0
      %553 = vmatprep.subr.mxu0 0.0
      %554 = vmatpush1.msra.mxu0 0.0
      %555 = vmatprep.subr.mxu0 0.0
      %556 = vmatpush1.msra.mxu0 0.0
      %557 = vmatprep.subr.mxu0 0.0
      %558 = vmatpush1.msra.mxu0 0.0
      %559 = vmatprep.subr.mxu0 0.0
      %560 = vmatpush1.msra.mxu0 0.0
      %561 = vmatprep.subr.mxu0 0.0
      %562 = vmatpush1.msra.mxu0 0.0
      %563 = vmatprep.subr.mxu0 0.0
      %564 = vmatpush1.msra.mxu0 0.0
      %565 = vmatprep.mubr.f32.mxu0 0.0
      %566 = vmatmul.mubr.f32.gmra.mrb[0].mxu0 %v493
      %v567 = vpop.f32.mrb[0].mxu0
      %v568 = vadd.f32 0.0, %v567
      %v569 = vpop.f32.mrb[0].mxu0
      %v570 = vadd.f32 0.0, %v569
      %571 = vdwg.mxu0
      %572 = vmatprep.subr.mxu0 0.0
      %573 = vmatpush1.msra.mxu0 %v499
      %574 = vmatprep.subr.mxu0 0.0
      %575 = vmatpush1.msra.mxu0 0.0
      %576 = vmatprep.subr.mxu0 0.0
      %577 = vmatpush1.msra.mxu0 0.0
      %578 = vmatprep.subr.mxu0 0.0
      %579 = vmatpush1.msra.mxu0 0.0
      %580 = vmatprep.subr.mxu0 0.0
      %581 = vmatpush1.msra.mxu0 0.0
      %582 = vmatprep.subr.mxu0 0.0
      %583 = vmatpush1.msra.mxu0 0.0
      %584 = vmatprep.subr.mxu0 0.0
      %585 = vmatpush1.msra.mxu0 0.0
      %586 = vmatprep.subr.mxu0 0.0
      %587 = vmatpush1.msra.mxu0 0.0
      %588 = vmatprep.subr.mxu0 0.0
      %589 = vmatpush1.msra.mxu0 0.0
      %590 = vmatprep.subr.mxu0 0.0
      %591 = vmatpush1.msra.mxu0 0.0
      %592 = vmatprep.subr.mxu0 0.0
      %593 = vmatpush1.msra.mxu0 0.0
      %594 = vmatprep.subr.mxu0 0.0
      %595 = vmatpush1.msra.mxu0 0.0
      %596 = vmatprep.subr.mxu0 0.0
      %597 = vmatpush1.msra.mxu0 0.0
      %598 = vmatprep.subr.mxu0 0.0
      %599 = vmatpush1.msra.mxu0 0.0
      %600 = vmatprep.subr.mxu0 0.0
      %601 = vmatpush1.msra.mxu0 0.0
      %602 = vmatprep.subr.mxu0 0.0
      %603 = vmatpush1.msra.mxu0 0.0
      %604 = vmatprep.subr.mxu0 0.0
      %605 = vmatpush1.msra.mxu0 0.0
      %606 = vmatprep.subr.mxu0 0.0
      %607 = vmatpush1.msra.mxu0 0.0
      %608 = vmatprep.subr.mxu0 0.0
      %609 = vmatpush1.msra.mxu0 0.0
      %610 = vmatprep.subr.mxu0 0.0
      %611 = vmatpush1.msra.mxu0 0.0
      %612 = vmatprep.subr.mxu0 0.0
      %613 = vmatpush1.msra.mxu0 0.0
      %614 = vmatprep.subr.mxu0 0.0
      %615 = vmatpush1.msra.mxu0 0.0
      %616 = vmatprep.subr.mxu0 0.0
      %617 = vmatpush1.msra.mxu0 0.0
      %618 = vmatprep.subr.mxu0 0.0
      %619 = vmatpush1.msra.mxu0 0.0
      %620 = vmatprep.subr.mxu0 0.0
      %621 = vmatpush1.msra.mxu0 0.0
      %622 = vmatprep.subr.mxu0 0.0
      %623 = vmatpush1.msra.mxu0 0.0
      %624 = vmatprep.subr.mxu0 0.0
      %625 = vmatpush1.msra.mxu0 0.0
      %626 = vmatprep.subr.mxu0 0.0
      %627 = vmatpush1.msra.mxu0 0.0
      %628 = vmatprep.subr.mxu0 0.0
      %629 = vmatpush1.msra.mxu0 0.0
      %630 = vmatprep.subr.mxu0 0.0
      %631 = vmatpush1.msra.mxu0 0.0
      %632 = vmatprep.subr.mxu0 0.0
      %633 = vmatpush1.msra.mxu0 0.0
      %634 = vmatprep.subr.mxu0 0.0
      %635 = vmatpush1.msra.mxu0 0.0
      %636 = vmatprep.mubr.f32.mxu0 0.0
      %637 = vmatmul.mubr.f32.gmra.mrb[0].mxu0 %v493
      %v638 = vpop.f32.mrb[0].mxu0
      %v639 = vadd.f32 0.0, %v638
      %v640 = vpop.f32.mrb[0].mxu0
      %641 = vdwg.mxu0
      %v642 = vadd.f32 %v398, %v568
      %v643 = vadd.f32 %v400, %v570
      %v644 = vadd.f32 %v469, %v639
      %v645 = vld [vmem:[%s138] sm:$0xff]
      %v646 = vld [vmem:[%s138 + $0x8] sm:$0xff]
      %s647 = scalar_lea.vmem %s1, 24
      %v648 = vld [vmem:[%s647] sm:$0x3f]
      %v651 = vcombine.high %v645, %v645
      %v652 = vcombine.high %v646, %v646
      %653 = vrot.lane.b32.xlu0 %v645, 110
      %v654 = vpop.permute.xlu0 %653
      %655 = vrot.lane.b32.xlu0 %v651, 110
      %v656 = vpop.permute.xlu0 %655
      %657 = vrot.lane.b32.xlu0 %v646, 110
      %v658 = vpop.permute.xlu0 %657
      %659 = vrot.lane.b32.xlu0 %v652, 110
      %v660 = vpop.permute.xlu0 %659
      %vm661 = vcmask 900096
      %v662 = vsel %vm661, %v654, %v656
      %v663 = vsel %vm661, %v656, %v658
      %v664 = vsel %vm661, %v658, %v660
      %v666 = vsel %vm167, %v648, 0
      %v668 = vsel %vm171, %v662, 0
      %v670 = vsel %vm171, %v663, 0
      %v672 = vsel %vm171, %v664, 0
      %674 = vmatprep.subr.mxu0 %v670
      %675 = vmatpush1.msra.mxu0 %v668
      %676 = vmatprep.subr.mxu0 0.0
      %677 = vmatpush1.msra.mxu0 0.0
      %678 = vmatprep.subr.mxu0 0.0
      %679 = vmatpush1.msra.mxu0 0.0
      %680 = vmatprep.subr.mxu0 0.0
      %681 = vmatpush1.msra.mxu0 0.0
      %682 = vmatprep.subr.mxu0 0.0
      %683 = vmatpush1.msra.mxu0 0.0
      %684 = vmatprep.subr.mxu0 0.0
      %685 = vmatpush1.msra.mxu0 0.0
      %686 = vmatprep.subr.mxu0 0.0
      %687 = vmatpush1.msra.mxu0 0.0
      %688 = vmatprep.subr.mxu0 0.0
      %689 = vmatpush1.msra.mxu0 0.0
      %690 = vmatprep.subr.mxu0 0.0
      %691 = vmatpush1.msra.mxu0 0.0
      %692 = vmatprep.subr.mxu0 0.0
      %693 = vmatpush1.msra.mxu0 0.0
      %694 = vmatprep.subr.mxu0 0.0
      %695 = vmatpush1.msra.mxu0 0.0
      %696 = vmatprep.subr.mxu0 0.0
      %697 = vmatpush1.msra.mxu0 0.0
      %698 = vmatprep.subr.mxu0 0.0
      %699 = vmatpush1.msra.mxu0 0.0
      %700 = vmatprep.subr.mxu0 0.0
      %701 = vmatpush1.msra.mxu0 0.0
      %702 = vmatprep.subr.mxu0 0.0
      %703 = vmatpush1.msra.mxu0 0.0
      %704 = vmatprep.subr.mxu0 0.0
      %705 = vmatpush1.msra.mxu0 0.0
      %706 = vmatprep.subr.mxu0 0.0
      %707 = vmatpush1.msra.mxu0 0.0
      %708 = vmatprep.subr.mxu0 0.0
      %709 = vmatpush1.msra.mxu0 0.0
      %710 = vmatprep.subr.mxu0 0.0
      %711 = vmatpush1.msra.mxu0 0.0
      %712 = vmatprep.subr.mxu0 0.0
      %713 = vmatpush1.msra.mxu0 0.0
      %714 = vmatprep.subr.mxu0 0.0
      %715 = vmatpush1.msra.mxu0 0.0
      %716 = vmatprep.subr.mxu0 0.0
      %717 = vmatpush1.msra.mxu0 0.0
      %718 = vmatprep.subr.mxu0 0.0
      %719 = vmatpush1.msra.mxu0 0.0
      %720 = vmatprep.subr.mxu0 0.0
      %721 = vmatpush1.msra.mxu0 0.0
      %722 = vmatprep.subr.mxu0 0.0
      %723 = vmatpush1.msra.mxu0 0.0
      %724 = vmatprep.subr.mxu0 0.0
      %725 = vmatpush1.msra.mxu0 0.0
      %726 = vmatprep.subr.mxu0 0.0
      %727 = vmatpush1.msra.mxu0 0.0
      %728 = vmatprep.subr.mxu0 0.0
      %729 = vmatpush1.msra.mxu0 0.0
      %730 = vmatprep.subr.mxu0 0.0
      %731 = vmatpush1.msra.mxu0 0.0
      %732 = vmatprep.subr.mxu0 0.0
      %733 = vmatpush1.msra.mxu0 0.0
      %734 = vmatprep.subr.mxu0 0.0
      %735 = vmatpush1.msra.mxu0 0.0
      %736 = vmatprep.subr.mxu0 0.0
      %737 = vmatpush1.msra.mxu0 0.0
      %738 = vmatprep.mubr.f32.mxu0 0.0
      %739 = vmatmul.mubr.f32.gmra.mrb[0].mxu0 %v666
      %v740 = vpop.f32.mrb[0].mxu0
      %v741 = vadd.f32 0.0, %v740
      %v742 = vpop.f32.mrb[0].mxu0
      %v743 = vadd.f32 0.0, %v742
      %744 = vdwg.mxu0
      %745 = vmatprep.subr.mxu0 0.0
      %746 = vmatpush1.msra.mxu0 %v672
      %747 = vmatprep.subr.mxu0 0.0
      %748 = vmatpush1.msra.mxu0 0.0
      %749 = vmatprep.subr.mxu0 0.0
      %750 = vmatpush1.msra.mxu0 0.0
      %751 = vmatprep.subr.mxu0 0.0
      %752 = vmatpush1.msra.mxu0 0.0
      %753 = vmatprep.subr.mxu0 0.0
      %754 = vmatpush1.msra.mxu0 0.0
      %755 = vmatprep.subr.mxu0 0.0
      %756 = vmatpush1.msra.mxu0 0.0
      %757 = vmatprep.subr.mxu0 0.0
      %758 = vmatpush1.msra.mxu0 0.0
      %759 = vmatprep.subr.mxu0 0.0
      %760 = vmatpush1.msra.mxu0 0.0
      %761 = vmatprep.subr.mxu0 0.0
      %762 = vmatpush1.msra.mxu0 0.0
      %763 = vmatprep.subr.mxu0 0.0
      %764 = vmatpush1.msra.mxu0 0.0
      %765 = vmatprep.subr.mxu0 0.0
      %766 = vmatpush1.msra.mxu0 0.0
      %767 = vmatprep.subr.mxu0 0.0
      %768 = vmatpush1.msra.mxu0 0.0
      %769 = vmatprep.subr.mxu0 0.0
      %770 = vmatpush1.msra.mxu0 0.0
      %771 = vmatprep.subr.mxu0 0.0
      %772 = vmatpush1.msra.mxu0 0.0
      %773 = vmatprep.subr.mxu0 0.0
      %774 = vmatpush1.msra.mxu0 0.0
      %775 = vmatprep.subr.mxu0 0.0
      %776 = vmatpush1.msra.mxu0 0.0
      %777 = vmatprep.subr.mxu0 0.0
      %778 = vmatpush1.msra.mxu0 0.0
      %779 = vmatprep.subr.mxu0 0.0
      %780 = vmatpush1.msra.mxu0 0.0
      %781 = vmatprep.subr.mxu0 0.0
      %782 = vmatpush1.msra.mxu0 0.0
      %783 = vmatprep.subr.mxu0 0.0
      %784 = vmatpush1.msra.mxu0 0.0
      %785 = vmatprep.subr.mxu0 0.0
      %786 = vmatpush1.msra.mxu0 0.0
      %787 = vmatprep.subr.mxu0 0.0
      %788 = vmatpush1.msra.mxu0 0.0
      %789 = vmatprep.subr.mxu0 0.0
      %790 = vmatpush1.msra.mxu0 0.0
      %791 = vmatprep.subr.mxu0 0.0
      %792 = vmatpush1.msra.mxu0 0.0
      %793 = vmatprep.subr.mxu0 0.0
      %794 = vmatpush1.msra.mxu0 0.0
      %795 = vmatprep.subr.mxu0 0.0
      %796 = vmatpush1.msra.mxu0 0.0
      %797 = vmatprep.subr.mxu0 0.0
      %798 = vmatpush1.msra.mxu0 0.0
      %799 = vmatprep.subr.mxu0 0.0
      %800 = vmatpush1.msra.mxu0 0.0
      %801 = vmatprep.subr.mxu0 0.0
      %802 = vmatpush1.msra.mxu0 0.0
      %803 = vmatprep.subr.mxu0 0.0
      %804 = vmatpush1.msra.mxu0 0.0
      %805 = vmatprep.subr.mxu0 0.0
      %806 = vmatpush1.msra.mxu0 0.0
      %807 = vmatprep.subr.mxu0 0.0
      %808 = vmatpush1.msra.mxu0 0.0
      %809 = vmatprep.mubr.f32.mxu0 0.0
      %810 = vmatmul.mubr.f32.gmra.mrb[0].mxu0 %v666
      %v811 = vpop.f32.mrb[0].mxu0
      %v812 = vadd.f32 0.0, %v811
      %v813 = vpop.f32.mrb[0].mxu0
      %814 = vdwg.mxu0
      %v815 = vadd.f32 %v642, %v741
      %v816 = vadd.f32 %v643, %v743
      %v817 = vadd.f32 %v644, %v812
      %v818 = vld [vmem:[%s138] sm:$0xff]
      %v819 = vld [vmem:[%s138 + $0x8] sm:$0xff]
      %s820 = scalar_lea.vmem %s1, 32
      %v821 = vld [vmem:[%s820] sm:$0x3f]
      %v824 = vcombine.high %v818, %v818
      %v825 = vcombine.high %v819, %v819
      %826 = vrot.lane.b32.xlu0 %v818, 109
      %v827 = vpop.permute.xlu0 %826
      %828 = vrot.lane.b32.xlu0 %v824, 109
      %v829 = vpop.permute.xlu0 %828
      %830 = vrot.lane.b32.xlu0 %v819, 109
      %v831 = vpop.permute.xlu0 %830
      %832 = vrot.lane.b32.xlu0 %v825, 109
      %v833 = vpop.permute.xlu0 %832
      %vm834 = vcmask 891904
      %v835 = vsel %vm834, %v827, %v829
      %v836 = vsel %vm834, %v829, %v831
      %v837 = vsel %vm834, %v831, %v833
      %v839 = vsel %vm167, %v821, 0
      %v841 = vsel %vm171, %v835, 0
      %v843 = vsel %vm171, %v836, 0
      %v845 = vsel %vm171, %v837, 0
      %847 = vmatprep.subr.mxu0 %v843
      %848 = vmatpush1.msra.mxu0 %v841
      %849 = vmatprep.subr.mxu0 0.0
      %850 = vmatpush1.msra.mxu0 0.0
      %851 = vmatprep.subr.mxu0 0.0
      %852 = vmatpush1.msra.mxu0 0.0
      %853 = vmatprep.subr.mxu0 0.0
      %854 = vmatpush1.msra.mxu0 0.0
      %855 = vmatprep.subr.mxu0 0.0
      %856 = vmatpush1.msra.mxu0 0.0
      %857 = vmatprep.subr.mxu0 0.0
      %858 = vmatpush1.msra.mxu0 0.0
      %859 = vmatprep.subr.mxu0 0.0
      %860 = vmatpush1.msra.mxu0 0.0
      %861 = vmatprep.subr.mxu0 0.0
      %862 = vmatpush1.msra.mxu0 0.0
      %863 = vmatprep.subr.mxu0 0.0
      %864 = vmatpush1.msra.mxu0 0.0
      %865 = vmatprep.subr.mxu0 0.0
      %866 = vmatpush1.msra.mxu0 0.0
      %867 = vmatprep.subr.mxu0 0.0
      %868 = vmatpush1.msra.mxu0 0.0
      %869 = vmatprep.subr.mxu0 0.0
      %870 = vmatpush1.msra.mxu0 0.0
      %871 = vmatprep.subr.mxu0 0.0
      %872 = vmatpush1.msra.mxu0 0.0
      %873 = vmatprep.subr.mxu0 0.0
      %874 = vmatpush1.msra.mxu0 0.0
      %875 = vmatprep.subr.mxu0 0.0
      %876 = vmatpush1.msra.mxu0 0.0
      %877 = vmatprep.subr.mxu0 0.0
      %878 = vmatpush1.msra.mxu0 0.0
      %879 = vmatprep.subr.mxu0 0.0
      %880 = vmatpush1.msra.mxu0 0.0
      %881 = vmatprep.subr.mxu0 0.0
      %882 = vmatpush1.msra.mxu0 0.0
      %883 = vmatprep.subr.mxu0 0.0
      %884 = vmatpush1.msra.mxu0 0.0
      %885 = vmatprep.subr.mxu0 0.0
      %886 = vmatpush1.msra.mxu0 0.0
      %887 = vmatprep.subr.mxu0 0.0
      %888 = vmatpush1.msra.mxu0 0.0
      %889 = vmatprep.subr.mxu0 0.0
      %890 = vmatpush1.msra.mxu0 0.0
      %891 = vmatprep.subr.mxu0 0.0
      %892 = vmatpush1.msra.mxu0 0.0
      %893 = vmatprep.subr.mxu0 0.0
      %894 = vmatpush1.msra.mxu0 0.0
      %895 = vmatprep.subr.mxu0 0.0
      %896 = vmatpush1.msra.mxu0 0.0
      %897 = vmatprep.subr.mxu0 0.0
      %898 = vmatpush1.msra.mxu0 0.0
      %899 = vmatprep.subr.mxu0 0.0
      %900 = vmatpush1.msra.mxu0 0.0
      %901 = vmatprep.subr.mxu0 0.0
      %902 = vmatpush1.msra.mxu0 0.0
      %903 = vmatprep.subr.mxu0 0.0
      %904 = vmatpush1.msra.mxu0 0.0
      %905 = vmatprep.subr.mxu0 0.0
      %906 = vmatpush1.msra.mxu0 0.0
      %907 = vmatprep.subr.mxu0 0.0
      %908 = vmatpush1.msra.mxu0 0.0
      %909 = vmatprep.subr.mxu0 0.0
      %910 = vmatpush1.msra.mxu0 0.0
      %911 = vmatprep.mubr.f32.mxu0 0.0
      %912 = vmatmul.mubr.f32.gmra.mrb[0].mxu0 %v839
      %v913 = vpop.f32.mrb[0].mxu0
      %v914 = vadd.f32 0.0, %v913
      %v915 = vpop.f32.mrb[0].mxu0
      %v916 = vadd.f32 0.0, %v915
      %917 = vdwg.mxu0
      %918 = vmatprep.subr.mxu0 0.0
      %919 = vmatpush1.msra.mxu0 %v845
      %920 = vmatprep.subr.mxu0 0.0
      %921 = vmatpush1.msra.mxu0 0.0
      %922 = vmatprep.subr.mxu0 0.0
      %923 = vmatpush1.msra.mxu0 0.0
      %924 = vmatprep.subr.mxu0 0.0
      %925 = vmatpush1.msra.mxu0 0.0
      %926 = vmatprep.subr.mxu0 0.0
      %927 = vmatpush1.msra.mxu0 0.0
      %928 = vmatprep.subr.mxu0 0.0
      %929 = vmatpush1.msra.mxu0 0.0
      %930 = vmatprep.subr.mxu0 0.0
      %931 = vmatpush1.msra.mxu0 0.0
      %932 = vmatprep.subr.mxu0 0.0
      %933 = vmatpush1.msra.mxu0 0.0
      %934 = vmatprep.subr.mxu0 0.0
      %935 = vmatpush1.msra.mxu0 0.0
      %936 = vmatprep.subr.mxu0 0.0
      %937 = vmatpush1.msra.mxu0 0.0
      %938 = vmatprep.subr.mxu0 0.0
      %939 = vmatpush1.msra.mxu0 0.0
      %940 = vmatprep.subr.mxu0 0.0
      %941 = vmatpush1.msra.mxu0 0.0
      %942 = vmatprep.subr.mxu0 0.0
      %943 = vmatpush1.msra.mxu0 0.0
      %944 = vmatprep.subr.mxu0 0.0
      %945 = vmatpush1.msra.mxu0 0.0
      %946 = vmatprep.subr.mxu0 0.0
      %947 = vmatpush1.msra.mxu0 0.0
      %948 = vmatprep.subr.mxu0 0.0
      %949 = vmatpush1.msra.mxu0 0.0
      %950 = vmatprep.subr.mxu0 0.0
      %951 = vmatpush1.msra.mxu0 0.0
      %952 = vmatprep.subr.mxu0 0.0
      %953 = vmatpush1.msra.mxu0 0.0
      %954 = vmatprep.subr.mxu0 0.0
      %955 = vmatpush1.msra.mxu0 0.0
      %956 = vmatprep.subr.mxu0 0.0
      %957 = vmatpush1.msra.mxu0 0.0
      %958 = vmatprep.subr.mxu0 0.0
      %959 = vmatpush1.msra.mxu0 0.0
      %960 = vmatprep.subr.mxu0 0.0
      %961 = vmatpush1.msra.mxu0 0.0
      %962 = vmatprep.subr.mxu0 0.0
      %963 = vmatpush1.msra.mxu0 0.0
      %964 = vmatprep.subr.mxu0 0.0
      %965 = vmatpush1.msra.mxu0 0.0
      %966 = vmatprep.subr.mxu0 0.0
      %967 = vmatpush1.msra.mxu0 0.0
      %968 = vmatprep.subr.mxu0 0.0
      %969 = vmatpush1.msra.mxu0 0.0
      %970 = vmatprep.subr.mxu0 0.0
      %971 = vmatpush1.msra.mxu0 0.0
      %972 = vmatprep.subr.mxu0 0.0
      %973 = vmatpush1.msra.mxu0 0.0
      %974 = vmatprep.subr.mxu0 0.0
      %975 = vmatpush1.msra.mxu0 0.0
      %976 = vmatprep.subr.mxu0 0.0
      %977 = vmatpush1.msra.mxu0 0.0
      %978 = vmatprep.subr.mxu0 0.0
      %979 = vmatpush1.msra.mxu0 0.0
      %980 = vmatprep.subr.mxu0 0.0
      %981 = vmatpush1.msra.mxu0 0.0
      %982 = vmatprep.mubr.f32.mxu0 0.0
      %983 = vmatmul.mubr.f32.gmra.mrb[0].mxu0 %v839
      %v984 = vpop.f32.mrb[0].mxu0
      %v985 = vadd.f32 0.0, %v984
      %v986 = vpop.f32.mrb[0].mxu0
      %987 = vdwg.mxu0
      %v988 = vadd.f32 %v815, %v914
      %v989 = vadd.f32 %v816, %v916
      %v990 = vadd.f32 %v817, %v985
      %v991 = vld [vmem:[%s138] sm:$0xff]
      %v992 = vld [vmem:[%s138 + $0x8] sm:$0xff]
      %s993 = scalar_lea.vmem %s1, 40
      %v994 = vld [vmem:[%s993] sm:$0x3f]
      %v997 = vcombine.high %v991, %v991
      %v998 = vcombine.high %v992, %v992
      %999 = vrot.lane.b32.xlu0 %v991, 108
      %v1000 = vpop.permute.xlu0 %999
      %1001 = vrot.lane.b32.xlu0 %v997, 108
      %v1002 = vpop.permute.xlu0 %1001
      %1003 = vrot.lane.b32.xlu0 %v992, 108
      %v1004 = vpop.permute.xlu0 %1003
      %1005 = vrot.lane.b32.xlu0 %v998, 108
      %v1006 = vpop.permute.xlu0 %1005
      %vm1007 = vcmask 883712
      %v1008 = vsel %vm1007, %v1000, %v1002
      %v1009 = vsel %vm1007, %v1002, %v1004
      %v1010 = vsel %vm1007, %v1004, %v1006
      %v1012 = vsel %vm167, %v994, 0
      %v1014 = vsel %vm171, %v1008, 0
      %v1016 = vsel %vm171, %v1009, 0
      %v1018 = vsel %vm171, %v1010, 0
      %1020 = vmatprep.subr.mxu0 %v1016
      %1021 = vmatpush1.msra.mxu0 %v1014
      %1022 = vmatprep.subr.mxu0 0.0
      %1023 = vmatpush1.msra.mxu0 0.0
      %1024 = vmatprep.subr.mxu0 0.0
      %1025 = vmatpush1.msra.mxu0 0.0
      %1026 = vmatprep.subr.mxu0 0.0
      %1027 = vmatpush1.msra.mxu0 0.0
      %1028 = vmatprep.subr.mxu0 0.0
      %1029 = vmatpush1.msra.mxu0 0.0
      %1030 = vmatprep.subr.mxu0 0.0
      %1031 = vmatpush1.msra.mxu0 0.0
      %1032 = vmatprep.subr.mxu0 0.0
      %1033 = vmatpush1.msra.mxu0 0.0
      %1034 = vmatprep.subr.mxu0 0.0
      %1035 = vmatpush1.msra.mxu0 0.0
      %1036 = vmatprep.subr.mxu0 0.0
      %1037 = vmatpush1.msra.mxu0 0.0
      %1038 = vmatprep.subr.mxu0 0.0
      %1039 = vmatpush1.msra.mxu0 0.0
      %1040 = vmatprep.subr.mxu0 0.0
      %1041 = vmatpush1.msra.mxu0 0.0
      %1042 = vmatprep.subr.mxu0 0.0
      %1043 = vmatpush1.msra.mxu0 0.0
      %1044 = vmatprep.subr.mxu0 0.0
      %1045 = vmatpush1.msra.mxu0 0.0
      %1046 = vmatprep.subr.mxu0 0.0
      %1047 = vmatpush1.msra.mxu0 0.0
      %1048 = vmatprep.subr.mxu0 0.0
      %1049 = vmatpush1.msra.mxu0 0.0
      %1050 = vmatprep.subr.mxu0 0.0
      %1051 = vmatpush1.msra.mxu0 0.0
      %1052 = vmatprep.subr.mxu0 0.0
      %1053 = vmatpush1.msra.mxu0 0.0
      %1054 = vmatprep.subr.mxu0 0.0
      %1055 = vmatpush1.msra.mxu0 0.0
      %1056 = vmatprep.subr.mxu0 0.0
      %1057 = vmatpush1.msra.mxu0 0.0
      %1058 = vmatprep.subr.mxu0 0.0
      %1059 = vmatpush1.msra.mxu0 0.0
      %1060 = vmatprep.subr.mxu0 0.0
      %1061 = vmatpush1.msra.mxu0 0.0
      %1062 = vmatprep.subr.mxu0 0.0
      %1063 = vmatpush1.msra.mxu0 0.0
      %1064 = vmatprep.subr.mxu0 0.0
      %1065 = vmatpush1.msra.mxu0 0.0
      %1066 = vmatprep.subr.mxu0 0.0
      %1067 = vmatpush1.msra.mxu0 0.0
      %1068 = vmatprep.subr.mxu0 0.0
      %1069 = vmatpush1.msra.mxu0 0.0
      %1070 = vmatprep.subr.mxu0 0.0
      %1071 = vmatpush1.msra.mxu0 0.0
      %1072 = vmatprep.subr.mxu0 0.0
      %1073 = vmatpush1.msra.mxu0 0.0
      %1074 = vmatprep.subr.mxu0 0.0
      %1075 = vmatpush1.msra.mxu0 0.0
      %1076 = vmatprep.subr.mxu0 0.0
      %1077 = vmatpush1.msra.mxu0 0.0
      %1078 = vmatprep.subr.mxu0 0.0
      %1079 = vmatpush1.msra.mxu0 0.0
      %1080 = vmatprep.subr.mxu0 0.0
      %1081 = vmatpush1.msra.mxu0 0.0
      %1082 = vmatprep.subr.mxu0 0.0
      %1083 = vmatpush1.msra.mxu0 0.0
      %1084 = vmatprep.mubr.f32.mxu0 0.0
      %1085 = vmatmul.mubr.f32.gmra.mrb[0].mxu0 %v1012
      %v1086 = vpop.f32.mrb[0].mxu0
      %v1087 = vadd.f32 0.0, %v1086
      %v1088 = vpop.f32.mrb[0].mxu0
      %v1089 = vadd.f32 0.0, %v1088
      %1090 = vdwg.mxu0
      %1091 = vmatprep.subr.mxu0 0.0
      %1092 = vmatpush1.msra.mxu0 %v1018
      %1093 = vmatprep.subr.mxu0 0.0
      %1094 = vmatpush1.msra.mxu0 0.0
      %1095 = vmatprep.subr.mxu0 0.0
      %1096 = vmatpush1.msra.mxu0 0.0
      %1097 = vmatprep.subr.mxu0 0.0
      %1098 = vmatpush1.msra.mxu0 0.0
      %1099 = vmatprep.subr.mxu0 0.0
      %1100 = vmatpush1.msra.mxu0 0.0
      %1101 = vmatprep.subr.mxu0 0.0
      %1102 = vmatpush1.msra.mxu0 0.0
      %1103 = vmatprep.subr.mxu0 0.0
      %1104 = vmatpush1.msra.mxu0 0.0
      %1105 = vmatprep.subr.mxu0 0.0
      %1106 = vmatpush1.msra.mxu0 0.0
      %1107 = vmatprep.subr.mxu0 0.0
      %1108 = vmatpush1.msra.mxu0 0.0
      %1109 = vmatprep.subr.mxu0 0.0
      %1110 = vmatpush1.msra.mxu0 0.0
      %1111 = vmatprep.subr.mxu0 0.0
      %1112 = vmatpush1.msra.mxu0 0.0
      %1113 = vmatprep.subr.mxu0 0.0
      %1114 = vmatpush1.msra.mxu0 0.0
      %1115 = vmatprep.subr.mxu0 0.0
      %1116 = vmatpush1.msra.mxu0 0.0
      %1117 = vmatprep.subr.mxu0 0.0
      %1118 = vmatpush1.msra.mxu0 0.0
      %1119 = vmatprep.subr.mxu0 0.0
      %1120 = vmatpush1.msra.mxu0 0.0
      %1121 = vmatprep.subr.mxu0 0.0
      %1122 = vmatpush1.msra.mxu0 0.0
      %1123 = vmatprep.subr.mxu0 0.0
      %1124 = vmatpush1.msra.mxu0 0.0
      %1125 = vmatprep.subr.mxu0 0.0
      %1126 = vmatpush1.msra.mxu0 0.0
      %1127 = vmatprep.subr.mxu0 0.0
      %1128 = vmatpush1.msra.mxu0 0.0
      %1129 = vmatprep.subr.mxu0 0.0
      %1130 = vmatpush1.msra.mxu0 0.0
      %1131 = vmatprep.subr.mxu0 0.0
      %1132 = vmatpush1.msra.mxu0 0.0
      %1133 = vmatprep.subr.mxu0 0.0
      %1134 = vmatpush1.msra.mxu0 0.0
      %1135 = vmatprep.subr.mxu0 0.0
      %1136 = vmatpush1.msra.mxu0 0.0
      %1137 = vmatprep.subr.mxu0 0.0
      %1138 = vmatpush1.msra.mxu0 0.0
      %1139 = vmatprep.subr.mxu0 0.0
      %1140 = vmatpush1.msra.mxu0 0.0
      %1141 = vmatprep.subr.mxu0 0.0
      %1142 = vmatpush1.msra.mxu0 0.0
      %1143 = vmatprep.subr.mxu0 0.0
      %1144 = vmatpush1.msra.mxu0 0.0
      %1145 = vmatprep.subr.mxu0 0.0
      %1146 = vmatpush1.msra.mxu0 0.0
      %1147 = vmatprep.subr.mxu0 0.0
      %1148 = vmatpush1.msra.mxu0 0.0
      %1149 = vmatprep.subr.mxu0 0.0
      %1150 = vmatpush1.msra.mxu0 0.0
      %1151 = vmatprep.subr.mxu0 0.0
      %1152 = vmatpush1.msra.mxu0 0.0
      %1153 = vmatprep.subr.mxu0 0.0
      %1154 = vmatpush1.msra.mxu0 0.0
      %1155 = vmatprep.mubr.f32.mxu0 0.0
      %1156 = vmatmul.mubr.f32.gmra.mrb[0].mxu0 %v1012
      %v1157 = vpop.f32.mrb[0].mxu0
      %v1158 = vadd.f32 0.0, %v1157
      %v1159 = vpop.f32.mrb[0].mxu0
      %1160 = vdwg.mxu0
      %v1161 = vadd.f32 %v988, %v1087
      %v1162 = vadd.f32 %v989, %v1089
      %v1163 = vadd.f32 %v990, %v1158
      %v1164 = vld [vmem:[%s138] sm:$0xff]
      %v1165 = vld [vmem:[%s138 + $0x8] sm:$0xff]
      %s1166 = scalar_lea.vmem %s1, 48
      %v1167 = vld [vmem:[%s1166] sm:$0x3f]
      %v1170 = vcombine.high %v1164, %v1164
      %v1171 = vcombine.high %v1165, %v1165
      %1172 = vrot.lane.b32.xlu0 %v1164, 92
      %v1173 = vpop.permute.xlu0 %1172
      %1174 = vrot.lane.b32.xlu0 %v1170, 92
      %v1175 = vpop.permute.xlu0 %1174
      %1176 = vrot.lane.b32.xlu0 %v1165, 92
      %v1177 = vpop.permute.xlu0 %1176
      %1178 = vrot.lane.b32.xlu0 %v1171, 92
      %v1179 = vpop.permute.xlu0 %1178
      %vm1180 = vcmask 752640
      %v1181 = vsel %vm1180, %v1173, %v1175
      %v1182 = vsel %vm1180, %v1175, %v1177
      %v1183 = vsel %vm1180, %v1177, %v1179
      %v1185 = vsel %vm167, %v1167, 0
      %v1187 = vsel %vm171, %v1181, 0
      %v1189 = vsel %vm171, %v1182, 0
      %v1191 = vsel %vm171, %v1183, 0
      %1193 = vmatprep.subr.mxu0 %v1189
      %1194 = vmatpush1.msra.mxu0 %v1187
      %1195 = vmatprep.subr.mxu0 0.0
      %1196 = vmatpush1.msra.mxu0 0.0
      %1197 = vmatprep.subr.mxu0 0.0
      %1198 = vmatpush1.msra.mxu0 0.0
      %1199 = vmatprep.subr.mxu0 0.0
      %1200 = vmatpush1.msra.mxu0 0.0
      %1201 = vmatprep.subr.mxu0 0.0
      %1202 = vmatpush1.msra.mxu0 0.0
      %1203 = vmatprep.subr.mxu0 0.0
      %1204 = vmatpush1.msra.mxu0 0.0
      %1205 = vmatprep.subr.mxu0 0.0
      %1206 = vmatpush1.msra.mxu0 0.0
      %1207 = vmatprep.subr.mxu0 0.0
      %1208 = vmatpush1.msra.mxu0 0.0
      %1209 = vmatprep.subr.mxu0 0.0
      %1210 = vmatpush1.msra.mxu0 0.0
      %1211 = vmatprep.subr.mxu0 0.0
      %1212 = vmatpush1.msra.mxu0 0.0
      %1213 = vmatprep.subr.mxu0 0.0
      %1214 = vmatpush1.msra.mxu0 0.0
      %1215 = vmatprep.subr.mxu0 0.0
      %1216 = vmatpush1.msra.mxu0 0.0
      %1217 = vmatprep.subr.mxu0 0.0
      %1218 = vmatpush1.msra.mxu0 0.0
      %1219 = vmatprep.subr.mxu0 0.0
      %1220 = vmatpush1.msra.mxu0 0.0
      %1221 = vmatprep.subr.mxu0 0.0
      %1222 = vmatpush1.msra.mxu0 0.0
      %1223 = vmatprep.subr.mxu0 0.0
      %1224 = vmatpush1.msra.mxu0 0.0
      %1225 = vmatprep.subr.mxu0 0.0
      %1226 = vmatpush1.msra.mxu0 0.0
      %1227 = vmatprep.subr.mxu0 0.0
      %1228 = vmatpush1.msra.mxu0 0.0
      %1229 = vmatprep.subr.mxu0 0.0
      %1230 = vmatpush1.msra.mxu0 0.0
      %1231 = vmatprep.subr.mxu0 0.0
      %1232 = vmatpush1.msra.mxu0 0.0
      %1233 = vmatprep.subr.mxu0 0.0
      %1234 = vmatpush1.msra.mxu0 0.0
      %1235 = vmatprep.subr.mxu0 0.0
      %1236 = vmatpush1.msra.mxu0 0.0
      %1237 = vmatprep.subr.mxu0 0.0
      %1238 = vmatpush1.msra.mxu0 0.0
      %1239 = vmatprep.subr.mxu0 0.0
      %1240 = vmatpush1.msra.mxu0 0.0
      %1241 = vmatprep.subr.mxu0 0.0
      %1242 = vmatpush1.msra.mxu0 0.0
      %1243 = vmatprep.subr.mxu0 0.0
      %1244 = vmatpush1.msra.mxu0 0.0
      %1245 = vmatprep.subr.mxu0 0.0
      %1246 = vmatpush1.msra.mxu0 0.0
      %1247 = vmatprep.subr.mxu0 0.0
      %1248 = vmatpush1.msra.mxu0 0.0
      %1249 = vmatprep.subr.mxu0 0.0
      %1250 = vmatpush1.msra.mxu0 0.0
      %1251 = vmatprep.subr.mxu0 0.0
      %1252 = vmatpush1.msra.mxu0 0.0
      %1253 = vmatprep.subr.mxu0 0.0
      %1254 = vmatpush1.msra.mxu0 0.0
      %1255 = vmatprep.subr.mxu0 0.0
      %1256 = vmatpush1.msra.mxu0 0.0
      %1257 = vmatprep.mubr.f32.mxu0 0.0
      %1258 = vmatmul.mubr.f32.gmra.mrb[0].mxu0 %v1185
      %v1259 = vpop.f32.mrb[0].mxu0
      %v1260 = vadd.f32 0.0, %v1259
      %v1261 = vpop.f32.mrb[0].mxu0
      %v1262 = vadd.f32 0.0, %v1261
      %1263 = vdwg.mxu0
      %1264 = vmatprep.subr.mxu0 0.0
      %1265 = vmatpush1.msra.mxu0 %v1191
      %1266 = vmatprep.subr.mxu0 0.0
      %1267 = vmatpush1.msra.mxu0 0.0
      %1268 = vmatprep.subr.mxu0 0.0
      %1269 = vmatpush1.msra.mxu0 0.0
      %1270 = vmatprep.subr.mxu0 0.0
      %1271 = vmatpush1.msra.mxu0 0.0
      %1272 = vmatprep.subr.mxu0 0.0
      %1273 = vmatpush1.msra.mxu0 0.0
      %1274 = vmatprep.subr.mxu0 0.0
      %1275 = vmatpush1.msra.mxu0 0.0
      %1276 = vmatprep.subr.mxu0 0.0
      %1277 = vmatpush1.msra.mxu0 0.0
      %1278 = vmatprep.subr.mxu0 0.0
      %1279 = vmatpush1.msra.mxu0 0.0
      %1280 = vmatprep.subr.mxu0 0.0
      %1281 = vmatpush1.msra.mxu0 0.0
      %1282 = vmatprep.subr.mxu0 0.0
      %1283 = vmatpush1.msra.mxu0 0.0
      %1284 = vmatprep.subr.mxu0 0.0
      %1285 = vmatpush1.msra.mxu0 0.0
      %1286 = vmatprep.subr.mxu0 0.0
      %1287 = vmatpush1.msra.mxu0 0.0
      %1288 = vmatprep.subr.mxu0 0.0
      %1289 = vmatpush1.msra.mxu0 0.0
      %1290 = vmatprep.subr.mxu0 0.0
      %1291 = vmatpush1.msra.mxu0 0.0
      %1292 = vmatprep.subr.mxu0 0.0
      %1293 = vmatpush1.msra.mxu0 0.0
      %1294 = vmatprep.subr.mxu0 0.0
      %1295 = vmatpush1.msra.mxu0 0.0
      %1296 = vmatprep.subr.mxu0 0.0
      %1297 = vmatpush1.msra.mxu0 0.0
      %1298 = vmatprep.subr.mxu0 0.0
      %1299 = vmatpush1.msra.mxu0 0.0
      %1300 = vmatprep.subr.mxu0 0.0
      %1301 = vmatpush1.msra.mxu0 0.0
      %1302 = vmatprep.subr.mxu0 0.0
      %1303 = vmatpush1.msra.mxu0 0.0
      %1304 = vmatprep.subr.mxu0 0.0
      %1305 = vmatpush1.msra.mxu0 0.0
      %1306 = vmatprep.subr.mxu0 0.0
      %1307 = vmatpush1.msra.mxu0 0.0
      %1308 = vmatprep.subr.mxu0 0.0
      %1309 = vmatpush1.msra.mxu0 0.0
      %1310 = vmatprep.subr.mxu0 0.0
      %1311 = vmatpush1.msra.mxu0 0.0
      %1312 = vmatprep.subr.mxu0 0.0
      %1313 = vmatpush1.msra.mxu0 0.0
      %1314 = vmatprep.subr.mxu0 0.0
      %1315 = vmatpush1.msra.mxu0 0.0
      %1316 = vmatprep.subr.mxu0 0.0
      %1317 = vmatpush1.msra.mxu0 0.0
      %1318 = vmatprep.subr.mxu0 0.0
      %1319 = vmatpush1.msra.mxu0 0.0
      %1320 = vmatprep.subr.mxu0 0.0
      %1321 = vmatpush1.msra.mxu0 0.0
      %1322 = vmatprep.subr.mxu0 0.0
      %1323 = vmatpush1.msra.mxu0 0.0
      %1324 = vmatprep.subr.mxu0 0.0
      %1325 = vmatpush1.msra.mxu0 0.0
      %1326 = vmatprep.subr.mxu0 0.0
      %1327 = vmatpush1.msra.mxu0 0.0
      %1328 = vmatprep.mubr.f32.mxu0 0.0
      %1329 = vmatmul.mubr.f32.gmra.mrb[0].mxu0 %v1185
      %v1330 = vpop.f32.mrb[0].mxu0
      %v1331 = vadd.f32 0.0, %v1330
      %v1332 = vpop.f32.mrb[0].mxu0
      %1333 = vdwg.mxu0
      %v1334 = vadd.f32 %v1161, %v1260
      %v1335 = vadd.f32 %v1162, %v1262
      %v1336 = vadd.f32 %v1163, %v1331
      %v1337 = vld [vmem:[%s138] sm:$0xff]
      %v1338 = vld [vmem:[%s138 + $0x8] sm:$0xff]
      %s1339 = scalar_lea.vmem %s1, 56
      %v1340 = vld [vmem:[%s1339] sm:$0x3f]
      %v1343 = vcombine.high %v1337, %v1337
      %v1344 = vcombine.high %v1338, %v1338
      %1345 = vrot.lane.b32.xlu0 %v1337, 91
      %v1346 = vpop.permute.xlu0 %1345
      %1347 = vrot.lane.b32.xlu0 %v1343, 91
      %v1348 = vpop.permute.xlu0 %1347
      %1349 = vrot.lane.b32.xlu0 %v1338, 91
      %v1350 = vpop.permute.xlu0 %1349
      %1351 = vrot.lane.b32.xlu0 %v1344, 91
      %v1352 = vpop.permute.xlu0 %1351
      %vm1353 = vcmask 744448
      %v1354 = vsel %vm1353, %v1346, %v1348
      %v1355 = vsel %vm1353, %v1348, %v1350
      %v1356 = vsel %vm1353, %v1350, %v1352
      %v1358 = vsel %vm167, %v1340, 0
      %v1360 = vsel %vm171, %v1354, 0
      %v1362 = vsel %vm171, %v1355, 0
      %v1364 = vsel %vm171, %v1356, 0
      %1366 = vmatprep.subr.mxu0 %v1362
      %1367 = vmatpush1.msra.mxu0 %v1360
      %1368 = vmatprep.subr.mxu0 0.0
      %1369 = vmatpush1.msra.mxu0 0.0
      %1370 = vmatprep.subr.mxu0 0.0
      %1371 = vmatpush1.msra.mxu0 0.0
      %1372 = vmatprep.subr.mxu0 0.0
      %1373 = vmatpush1.msra.mxu0 0.0
      %1374 = vmatprep.subr.mxu0 0.0
      %1375 = vmatpush1.msra.mxu0 0.0
      %1376 = vmatprep.subr.mxu0 0.0
      %1377 = vmatpush1.msra.mxu0 0.0
      %1378 = vmatprep.subr.mxu0 0.0
      %1379 = vmatpush1.msra.mxu0 0.0
      %1380 = vmatprep.subr.mxu0 0.0
      %1381 = vmatpush1.msra.mxu0 0.0
      %1382 = vmatprep.subr.mxu0 0.0
      %1383 = vmatpush1.msra.mxu0 0.0
      %1384 = vmatprep.subr.mxu0 0.0
      %1385 = vmatpush1.msra.mxu0 0.0
      %1386 = vmatprep.subr.mxu0 0.0
      %1387 = vmatpush1.msra.mxu0 0.0
      %1388 = vmatprep.subr.mxu0 0.0
      %1389 = vmatpush1.msra.mxu0 0.0
      %1390 = vmatprep.subr.mxu0 0.0
      %1391 = vmatpush1.msra.mxu0 0.0
      %1392 = vmatprep.subr.mxu0 0.0
      %1393 = vmatpush1.msra.mxu0 0.0
      %1394 = vmatprep.subr.mxu0 0.0
      %1395 = vmatpush1.msra.mxu0 0.0
      %1396 = vmatprep.subr.mxu0 0.0
      %1397 = vmatpush1.msra.mxu0 0.0
      %1398 = vmatprep.subr.mxu0 0.0
      %1399 = vmatpush1.msra.mxu0 0.0
      %1400 = vmatprep.subr.mxu0 0.0
      %1401 = vmatpush1.msra.mxu0 0.0
      %1402 = vmatprep.subr.mxu0 0.0
      %1403 = vmatpush1.msra.mxu0 0.0
      %1404 = vmatprep.subr.mxu0 0.0
      %1405 = vmatpush1.msra.mxu0 0.0
      %1406 = vmatprep.subr.mxu0 0.0
      %1407 = vmatpush1.msra.mxu0 0.0
      %1408 = vmatprep.subr.mxu0 0.0
      %1409 = vmatpush1.msra.mxu0 0.0
      %1410 = vmatprep.subr.mxu0 0.0
      %1411 = vmatpush1.msra.mxu0 0.0
      %1412 = vmatprep.subr.mxu0 0.0
      %1413 = vmatpush1.msra.mxu0 0.0
      %1414 = vmatprep.subr.mxu0 0.0
      %1415 = vmatpush1.msra.mxu0 0.0
      %1416 = vmatprep.subr.mxu0 0.0
      %1417 = vmatpush1.msra.mxu0 0.0
      %1418 = vmatprep.subr.mxu0 0.0
      %1419 = vmatpush1.msra.mxu0 0.0
      %1420 = vmatprep.subr.mxu0 0.0
      %1421 = vmatpush1.msra.mxu0 0.0
      %1422 = vmatprep.subr.mxu0 0.0
      %1423 = vmatpush1.msra.mxu0 0.0
      %1424 = vmatprep.subr.mxu0 0.0
      %1425 = vmatpush1.msra.mxu0 0.0
      %1426 = vmatprep.subr.mxu0 0.0
      %1427 = vmatpush1.msra.mxu0 0.0
      %1428 = vmatprep.subr.mxu0 0.0
      %1429 = vmatpush1.msra.mxu0 0.0
      %1430 = vmatprep.mubr.f32.mxu0 0.0
      %1431 = vmatmul.mubr.f32.gmra.mrb[0].mxu0 %v1358
      %v1432 = vpop.f32.mrb[0].mxu0
      %v1433 = vadd.f32 0.0, %v1432
      %v1434 = vpop.f32.mrb[0].mxu0
      %v1435 = vadd.f32 0.0, %v1434
      %1436 = vdwg.mxu0
      %1437 = vmatprep.subr.mxu0 0.0
      %1438 = vmatpush1.msra.mxu0 %v1364
      %1439 = vmatprep.subr.mxu0 0.0
      %1440 = vmatpush1.msra.mxu0 0.0
      %1441 = vmatprep.subr.mxu0 0.0
      %1442 = vmatpush1.msra.mxu0 0.0
      %1443 = vmatprep.subr.mxu0 0.0
      %1444 = vmatpush1.msra.mxu0 0.0
      %1445 = vmatprep.subr.mxu0 0.0
      %1446 = vmatpush1.msra.mxu0 0.0
      %1447 = vmatprep.subr.mxu0 0.0
      %1448 = vmatpush1.msra.mxu0 0.0
      %1449 = vmatprep.subr.mxu0 0.0
      %1450 = vmatpush1.msra.mxu0 0.0
      %1451 = vmatprep.subr.mxu0 0.0
      %1452 = vmatpush1.msra.mxu0 0.0
      %1453 = vmatprep.subr.mxu0 0.0
      %1454 = vmatpush1.msra.mxu0 0.0
      %1455 = vmatprep.subr.mxu0 0.0
      %1456 = vmatpush1.msra.mxu0 0.0
      %1457 = vmatprep.subr.mxu0 0.0
      %1458 = vmatpush1.msra.mxu0 0.0
      %1459 = vmatprep.subr.mxu0 0.0
      %1460 = vmatpush1.msra.mxu0 0.0
      %1461 = vmatprep.subr.mxu0 0.0
      %1462 = vmatpush1.msra.mxu0 0.0
      %1463 = vmatprep.subr.mxu0 0.0
      %1464 = vmatpush1.msra.mxu0 0.0
      %1465 = vmatprep.subr.mxu0 0.0
      %1466 = vmatpush1.msra.mxu0 0.0
      %1467 = vmatprep.subr.mxu0 0.0
      %1468 = vmatpush1.msra.mxu0 0.0
      %1469 = vmatprep.subr.mxu0 0.0
      %1470 = vmatpush1.msra.mxu0 0.0
      %1471 = vmatprep.subr.mxu0 0.0
      %1472 = vmatpush1.msra.mxu0 0.0
      %1473 = vmatprep.subr.mxu0 0.0
      %1474 = vmatpush1.msra.mxu0 0.0
      %1475 = vmatprep.subr.mxu0 0.0
      %1476 = vmatpush1.msra.mxu0 0.0
      %1477 = vmatprep.subr.mxu0 0.0
      %1478 = vmatpush1.msra.mxu0 0.0
      %1479 = vmatprep.subr.mxu0 0.0
      %1480 = vmatpush1.msra.mxu0 0.0
      %1481 = vmatprep.subr.mxu0 0.0
      %1482 = vmatpush1.msra.mxu0 0.0
      %1483 = vmatprep.subr.mxu0 0.0
      %1484 = vmatpush1.msra.mxu0 0.0
      %1485 = vmatprep.subr.mxu0 0.0
      %1486 = vmatpush1.msra.mxu0 0.0
      %1487 = vmatprep.subr.mxu0 0.0
      %1488 = vmatpush1.msra.mxu0 0.0
      %1489 = vmatprep.subr.mxu0 0.0
      %1490 = vmatpush1.msra.mxu0 0.0
      %1491 = vmatprep.subr.mxu0 0.0
      %1492 = vmatpush1.msra.mxu0 0.0
      %1493 = vmatprep.subr.mxu0 0.0
      %1494 = vmatpush1.msra.mxu0 0.0
      %1495 = vmatprep.subr.mxu0 0.0
      %1496 = vmatpush1.msra.mxu0 0.0
      %1497 = vmatprep.subr.mxu0 0.0
      %1498 = vmatpush1.msra.mxu0 0.0
      %1499 = vmatprep.subr.mxu0 0.0
      %1500 = vmatpush1.msra.mxu0 0.0
      %1501 = vmatprep.mubr.f32.mxu0 0.0
      %1502 = vmatmul.mubr.f32.gmra.mrb[0].mxu0 %v1358
      %v1503 = vpop.f32.mrb[0].mxu0
      %v1504 = vadd.f32 0.0, %v1503
      %v1505 = vpop.f32.mrb[0].mxu0
      %1506 = vdwg.mxu0
      %v1507 = vadd.f32 %v1334, %v1433
      %v1508 = vadd.f32 %v1335, %v1435
      %v1509 = vadd.f32 %v1336, %v1504
      %v1510 = vld [vmem:[%s138] sm:$0xff]
      %v1511 = vld [vmem:[%s138 + $0x8] sm:$0xff]
      %s1512 = scalar_lea.vmem %s1, 64
      %v1513 = vld [vmem:[%s1512] sm:$0x3f]
      %v1516 = vcombine.high %v1510, %v1510
      %v1517 = vcombine.high %v1511, %v1511
      %1518 = vrot.lane.b32.xlu0 %v1510, 90
      %v1519 = vpop.permute.xlu0 %1518
      %1520 = vrot.lane.b32.xlu0 %v1516, 90
      %v1521 = vpop.permute.xlu0 %1520
      %1522 = vrot.lane.b32.xlu0 %v1511, 90
      %v1523 = vpop.permute.xlu0 %1522
      %1524 = vrot.lane.b32.xlu0 %v1517, 90
      %v1525 = vpop.permute.xlu0 %1524
      %vm1526 = vcmask 736256
      %v1527 = vsel %vm1526, %v1519, %v1521
      %v1528 = vsel %vm1526, %v1521, %v1523
      %v1529 = vsel %vm1526, %v1523, %v1525
      %v1531 = vsel %vm167, %v1513, 0
      %v1533 = vsel %vm171, %v1527, 0
      %v1535 = vsel %vm171, %v1528, 0
      %v1537 = vsel %vm171, %v1529, 0
      %1539 = vmatprep.subr.mxu0 %v1535
      %1540 = vmatpush1.msra.mxu0 %v1533
      %1541 = vmatprep.subr.mxu0 0.0
      %1542 = vmatpush1.msra.mxu0 0.0
      %1543 = vmatprep.subr.mxu0 0.0
      %1544 = vmatpush1.msra.mxu0 0.0
      %1545 = vmatprep.subr.mxu0 0.0
      %1546 = vmatpush1.msra.mxu0 0.0
      %1547 = vmatprep.subr.mxu0 0.0
      %1548 = vmatpush1.msra.mxu0 0.0
      %1549 = vmatprep.subr.mxu0 0.0
      %1550 = vmatpush1.msra.mxu0 0.0
      %1551 = vmatprep.subr.mxu0 0.0
      %1552 = vmatpush1.msra.mxu0 0.0
      %1553 = vmatprep.subr.mxu0 0.0
      %1554 = vmatpush1.msra.mxu0 0.0
      %1555 = vmatprep.subr.mxu0 0.0
      %1556 = vmatpush1.msra.mxu0 0.0
      %1557 = vmatprep.subr.mxu0 0.0
      %1558 = vmatpush1.msra.mxu0 0.0
      %1559 = vmatprep.subr.mxu0 0.0
      %1560 = vmatpush1.msra.mxu0 0.0
      %1561 = vmatprep.subr.mxu0 0.0
      %1562 = vmatpush1.msra.mxu0 0.0
      %1563 = vmatprep.subr.mxu0 0.0
      %1564 = vmatpush1.msra.mxu0 0.0
      %1565 = vmatprep.subr.mxu0 0.0
      %1566 = vmatpush1.msra.mxu0 0.0
      %1567 = vmatprep.subr.mxu0 0.0
      %1568 = vmatpush1.msra.mxu0 0.0
      %1569 = vmatprep.subr.mxu0 0.0
      %1570 = vmatpush1.msra.mxu0 0.0
      %1571 = vmatprep.subr.mxu0 0.0
      %1572 = vmatpush1.msra.mxu0 0.0
      %1573 = vmatprep.subr.mxu0 0.0
      %1574 = vmatpush1.msra.mxu0 0.0
      %1575 = vmatprep.subr.mxu0 0.0
      %1576 = vmatpush1.msra.mxu0 0.0
      %1577 = vmatprep.subr.mxu0 0.0
      %1578 = vmatpush1.msra.mxu0 0.0
      %1579 = vmatprep.subr.mxu0 0.0
      %1580 = vmatpush1.msra.mxu0 0.0
      %1581 = vmatprep.subr.mxu0 0.0
      %1582 = vmatpush1.msra.mxu0 0.0
      %1583 = vmatprep.subr.mxu0 0.0
      %1584 = vmatpush1.msra.mxu0 0.0
      %1585 = vmatprep.subr.mxu0 0.0
      %1586 = vmatpush1.msra.mxu0 0.0
      %1587 = vmatprep.subr.mxu0 0.0
      %1588 = vmatpush1.msra.mxu0 0.0
      %1589 = vmatprep.subr.mxu0 0.0
      %1590 = vmatpush1.msra.mxu0 0.0
      %1591 = vmatprep.subr.mxu0 0.0
      %1592 = vmatpush1.msra.mxu0 0.0
      %1593 = vmatprep.subr.mxu0 0.0
      %1594 = vmatpush1.msra.mxu0 0.0
      %1595 = vmatprep.subr.mxu0 0.0
      %1596 = vmatpush1.msra.mxu0 0.0
      %1597 = vmatprep.subr.mxu0 0.0
      %1598 = vmatpush1.msra.mxu0 0.0
      %1599 = vmatprep.subr.mxu0 0.0
      %1600 = vmatpush1.msra.mxu0 0.0
      %1601 = vmatprep.subr.mxu0 0.0
      %1602 = vmatpush1.msra.mxu0 0.0
      %1603 = vmatprep.mubr.f32.mxu0 0.0
      %1604 = vmatmul.mubr.f32.gmra.mrb[0].mxu0 %v1531
      %v1605 = vpop.f32.mrb[0].mxu0
      %v1606 = vadd.f32 0.0, %v1605
      %v1607 = vpop.f32.mrb[0].mxu0
      %v1608 = vadd.f32 0.0, %v1607
      %1609 = vdwg.mxu0
      %1610 = vmatprep.subr.mxu0 0.0
      %1611 = vmatpush1.msra.mxu0 %v1537
      %1612 = vmatprep.subr.mxu0 0.0
      %1613 = vmatpush1.msra.mxu0 0.0
      %1614 = vmatprep.subr.mxu0 0.0
      %1615 = vmatpush1.msra.mxu0 0.0
      %1616 = vmatprep.subr.mxu0 0.0
      %1617 = vmatpush1.msra.mxu0 0.0
      %1618 = vmatprep.subr.mxu0 0.0
      %1619 = vmatpush1.msra.mxu0 0.0
      %1620 = vmatprep.subr.mxu0 0.0
      %1621 = vmatpush1.msra.mxu0 0.0
      %1622 = vmatprep.subr.mxu0 0.0
      %1623 = vmatpush1.msra.mxu0 0.0
      %1624 = vmatprep.subr.mxu0 0.0
      %1625 = vmatpush1.msra.mxu0 0.0
      %1626 = vmatprep.subr.mxu0 0.0
      %1627 = vmatpush1.msra.mxu0 0.0
      %1628 = vmatprep.subr.mxu0 0.0
      %1629 = vmatpush1.msra.mxu0 0.0
      %1630 = vmatprep.subr.mxu0 0.0
      %1631 = vmatpush1.msra.mxu0 0.0
      %1632 = vmatprep.subr.mxu0 0.0
      %1633 = vmatpush1.msra.mxu0 0.0
      %1634 = vmatprep.subr.mxu0 0.0
      %1635 = vmatpush1.msra.mxu0 0.0
      %1636 = vmatprep.subr.mxu0 0.0
      %1637 = vmatpush1.msra.mxu0 0.0
      %1638 = vmatprep.subr.mxu0 0.0
      %1639 = vmatpush1.msra.mxu0 0.0
      %1640 = vmatprep.subr.mxu0 0.0
      %1641 = vmatpush1.msra.mxu0 0.0
      %1642 = vmatprep.subr.mxu0 0.0
      %1643 = vmatpush1.msra.mxu0 0.0
      %1644 = vmatprep.subr.mxu0 0.0
      %1645 = vmatpush1.msra.mxu0 0.0
      %1646 = vmatprep.subr.mxu0 0.0
      %1647 = vmatpush1.msra.mxu0 0.0
      %1648 = vmatprep.subr.mxu0 0.0
      %1649 = vmatpush1.msra.mxu0 0.0
      %1650 = vmatprep.subr.mxu0 0.0
      %1651 = vmatpush1.msra.mxu0 0.0
      %1652 = vmatprep.subr.mxu0 0.0
      %1653 = vmatpush1.msra.mxu0 0.0
      %1654 = vmatprep.subr.mxu0 0.0
      %1655 = vmatpush1.msra.mxu0 0.0
      %1656 = vmatprep.subr.mxu0 0.0
      %1657 = vmatpush1.msra.mxu0 0.0
      %1658 = vmatprep.subr.mxu0 0.0
      %1659 = vmatpush1.msra.mxu0 0.0
      %1660 = vmatprep.subr.mxu0 0.0
      %1661 = vmatpush1.msra.mxu0 0.0
      %1662 = vmatprep.subr.mxu0 0.0
      %1663 = vmatpush1.msra.mxu0 0.0
      %1664 = vmatprep.subr.mxu0 0.0
      %1665 = vmatpush1.msra.mxu0 0.0
      %1666 = vmatprep.subr.mxu0 0.0
      %1667 = vmatpush1.msra.mxu0 0.0
      %1668 = vmatprep.subr.mxu0 0.0
      %1669 = vmatpush1.msra.mxu0 0.0
      %1670 = vmatprep.subr.mxu0 0.0
      %1671 = vmatpush1.msra.mxu0 0.0
      %1672 = vmatprep.subr.mxu0 0.0
      %1673 = vmatpush1.msra.mxu0 0.0
      %1674 = vmatprep.mubr.f32.mxu0 0.0
      %1675 = vmatmul.mubr.f32.gmra.mrb[0].mxu0 %v1531
      %v1676 = vpop.f32.mrb[0].mxu0
      %v1677 = vadd.f32 0.0, %v1676
      %v1678 = vpop.f32.mrb[0].mxu0
      %1679 = vdwg.mxu0
      %v1680 = vadd.f32 %v1507, %v1606
      %v1681 = vadd.f32 %v1508, %v1608
      %v1682 = vadd.f32 %v1509, %v1677
      %1683 = vst [vmem:[%s143] sm:$0x3f] %v1680
      %1684 = vst [vmem:[%s143 + $0x8] sm:$0x3f] %v1681
      %1685 = vst [vmem:[%s143 + $0x10] sm:$0x3f] %v1682
      %p1686 = scmp.lt.s32.totalorder %s13, 1
      %s1687 = scalar_select %p1686, %s13, 1
      %s1688 = smul.addr %s1687, 3
      %s1689 = smul.addr %s1688, 8
      %s1690 = scalar_lea.vmem %s2, %s1689
      // Predicated region
      $region29: #{decomposed_conv2d.1} parent=27 // pred_check
        %p1691 = pneg %p78
      $region30: #{decomposed_conv2d.1} parent=27 // pred_check_branch
        %1693 = sbr.rel (%p1691) target = $region32
      $region31: #{decomposed_conv2d.1} parent=27 // pred_region
        _
      $region32: #{decomposed_conv2d.1} parent=27 // pred_fallthru
        _
    $region28: #{decomposed_conv2d.1} parent=5 // pred_fallthru
      _
    %p1694 = scmp.le.s32.totalorder 2, %s8
    // Predicated region
    $region33: #{decomposed_conv2d.1} parent=5 // pred_check
      %p1695 = pneg %p1694
    $region34: #{decomposed_conv2d.1} parent=5 // pred_check_branch
      %1697 = sbr.rel (%p1695) target = $region36
    $region35: #{decomposed_conv2d.1} parent=5 // pred_region
      %s1698 = ssub.s32 %s8, 2
      // Predicated region
      $region37: #{decomposed_conv2d.1} parent=35 // pred_check
        %p1699 = pneg %p84
      $region38: #{decomposed_conv2d.1} parent=35 // pred_check_branch
        %1701 = sbr.rel (%p1699) target = $region40
      $region39: #{decomposed_conv2d.1} parent=35 // pred_region
        %p1702 = scmp.lt.s32.totalorder %s14, 1
        %s1703 = scalar_select %p1702, %s14, 1
        %s1704 = smul.addr %s1703, 3
        %s1705 = smul.addr %s1704, 8
        %s1706 = scalar_lea.vmem %s2, %s1705
      $region40: #{decomposed_conv2d.1} parent=35 // pred_fallthru
        _
    $region36: #{decomposed_conv2d.1} parent=5 // pred_fallthru
      _
  $region6: #{decomposed_conv2d.1} parent=0 // loop_footer
    %s12 = sadd.s32 1, %s8
  $region7: #{decomposed_conv2d.1} parent=0 // loop_footer_branch
    %7 = sbr.rel target = $region3
  $region8: #{decomposed_conv2d.1} parent=0 // loop_exit
    _

</llo_original>
